<compile_context>
chip_gen: v6e
topology: v6e:2x2x1
jax: 0.10.0
libtpu: 0.0.40
codegen_flags: <defaults>
</compile_context>

<pallas_src>
import functools

import jax
import jax.numpy as jnp
import numpy as np
from jax.experimental import pallas as pl
from jax.experimental.pallas import tpu as pltpu

BN_EPS = 1e-5


def _round_up(v, m):
    return (v + m - 1) // m * m


def _nonlocal_kernel(xq_ref, xk_ref,
                     wth_ref, bth_ref,
                     wph_ref, bph_ref,
                     wg_ref, bg_ref,
                     ww_ref, scale_ref, shift_ref,
                     o_ref,
                     theta_sc, m_sc, l_sc, acc_sc,
                     *, n_actual, tile, mask_keys, compute_dtype):
    """One (batch, q-tile, kv-tile) grid step of the non-local block."""
    ki = pl.program_id(2)
    nk = pl.num_programs(2)

    # ---- init per q-tile state & compute theta once per q tile -------------
    @pl.when(ki == 0)
    def _():
        xq = xq_ref[0].astype(compute_dtype)                              # (tq, Cp)
        theta_sc[...] = (jnp.dot(xq, wth_ref[...],
                                 preferred_element_type=jnp.float32)
                         + bth_ref[...])                                  # (tq, Cip)
        m_sc[...] = jnp.full_like(m_sc, -jnp.inf)
        l_sc[...] = jnp.zeros_like(l_sc)
        acc_sc[...] = jnp.zeros_like(acc_sc)

    # ---- key/value projections for this kv tile ----------------------------
    xk = xk_ref[0].astype(compute_dtype)                                  # (tk, Cp)
    phi = (jnp.dot(xk, wph_ref[...], preferred_element_type=jnp.float32)
           + bph_ref[...])                                                # (tk, Cip)
    g = (jnp.dot(xk, wg_ref[...], preferred_element_type=jnp.float32)
         + bg_ref[...])                                                   # (tk, Cip)

    # f = theta @ phi^T without materializing a transposed phi tile.
    f = jax.lax.dot_general(
        theta_sc[...].astype(compute_dtype), phi.astype(compute_dtype),
        (((1,), (1,)), ((), ())),
        preferred_element_type=jnp.float32)                               # (tq, tk)

    if mask_keys:
        # Zero-padded key positions (N padded up to a tile multiple) must not
        # participate in the softmax.
        k_idx = ki * tile + jax.lax.broadcasted_iota(jnp.int32, (1, tile), 1)
        f = jnp.where(k_idx < n_actual, f, -1e30)

    # ---- online softmax update ----------------------------------------------
    m_prev = m_sc[...]
    m_new = jnp.maximum(m_prev, jnp.max(f, axis=-1, keepdims=True))
    alpha = jnp.exp(m_prev - m_new)
    p = jnp.exp(f - m_new)
    l_sc[...] = alpha * l_sc[...] + jnp.sum(p, axis=-1, keepdims=True)
    acc_sc[...] = alpha * acc_sc[...] + jnp.dot(
        p.astype(compute_dtype), g.astype(compute_dtype),
        preferred_element_type=jnp.float32)
    m_sc[...] = m_new

    # ---- finalize: normalize, W conv, folded BN, residual -------------------
    @pl.when(ki == nk - 1)
    def _():
        use_approx = jnp.dtype(compute_dtype) == jnp.dtype(jnp.bfloat16)
        inv_l = pl.reciprocal(l_sc[...], approx=bool(use_approx))         # (tq, 1)
        y = (acc_sc[...] * inv_l).astype(compute_dtype)                   # (tq, Cip)
        wy = jnp.dot(y, ww_ref[...], preferred_element_type=jnp.float32)  # (tq, Cp)
        out = wy * scale_ref[...] + shift_ref[...] + xq_ref[0].astype(jnp.float32)
        o_ref[0] = out.astype(o_ref.dtype)


def nonlocal_block(x_ncthw, params, *, compute_dtype=jnp.float32, q_tile=256):
    """x_ncthw: (B, C, T, H, W) float32.  params: PyTorch-layout weights."""
    b, c, t, h, w = x_ncthw.shape
    n = t * h * w
    ci = params["w_theta"].shape[0]

    # Lane-friendly padded channel sizes; N padded to a tile multiple.
    cp = _round_up(c, 128)
    cip = _round_up(ci, 128)
    tile = min(q_tile, _round_up(n, 8))           # q-tile == kv-tile size
    n_pad = _round_up(n, tile)
    mask_keys = n_pad != n

    # NCTHW -> (B, N, C), channels last, zero-pad channels and sequence.
    # TODO(synk): fuse this layout change / padding into the producer to avoid
    # the extra full-tensor HBM passes when this block sits inside a network.
    x_bnc = jnp.transpose(x_ncthw.reshape(b, c, n), (0, 2, 1))
    x_bnc = jnp.pad(x_bnc, ((0, 0), (0, n_pad - n), (0, cp - c)))

    def pad2(a, rows, cols):
        return jnp.pad(a, ((0, rows - a.shape[0]), (0, cols - a.shape[1])))

    def pad_row(v, cols):
        v = v.reshape(1, -1)
        return jnp.pad(v, ((0, 0), (0, cols - v.shape[1]))).astype(jnp.float32)

    # Pre-transposed, padded weights (matmul dtype = compute_dtype).
    w_th = pad2(params["w_theta"].T, cp, cip).astype(compute_dtype)   # (Cp, Cip)
    w_ph = pad2(params["w_phi"].T, cp, cip).astype(compute_dtype)
    w_g = pad2(params["w_g"].T, cp, cip).astype(compute_dtype)
    w_w = pad2(params["w_W"].T, cip, cp).astype(compute_dtype)        # (Cip, Cp)

    b_th = pad_row(params["b_theta"], cip)
    b_ph = pad_row(params["b_phi"], cip)
    b_g = pad_row(params["b_g"], cip)

    # Fold BatchNorm (eval-mode running stats) + W-conv bias into scale/shift.
    scale = params["bn_gamma"] * jax.lax.rsqrt(params["bn_var"] + BN_EPS)
    shift = (params["b_W"] - params["bn_mean"]) * scale + params["bn_beta"]
    scale = pad_row(scale, cp)
    shift = pad_row(shift, cp)

    n_tiles = n_pad // tile
    grid = (b, n_tiles, n_tiles)

    kernel = functools.partial(
        _nonlocal_kernel,
        n_actual=n, tile=tile, mask_keys=mask_keys, compute_dtype=compute_dtype)

    def wfull(shape):
        return pl.BlockSpec(shape, lambda bi, qi, ki: (0, 0))

    # Advisory cost estimate so XLA schedules surrounding ops sensibly.
    flops = int(b * (3 * 2 * n_pad * cp * cip          # theta/phi/g projections
                     + 2 * 2 * n_pad * n_pad * cip     # QK^T and PV
                     + 2 * n_pad * cip * cp))          # W conv
    transcendentals = int(b * n_pad * n_pad)
    bytes_accessed = int(4 * (3 * b * n_pad * cp + 4 * cp * cip))

    out = pl.pallas_call(
        kernel,
        out_shape=jax.ShapeDtypeStruct((b, n_pad, cp), x_bnc.dtype),
        grid=grid,
        in_specs=[
            pl.BlockSpec((1, tile, cp), lambda bi, qi, ki: (bi, qi, 0)),  # x (query rows)
            pl.BlockSpec((1, tile, cp), lambda bi, qi, ki: (bi, ki, 0)),  # x (key rows)
            wfull((cp, cip)), wfull((1, cip)),                            # theta
            wfull((cp, cip)), wfull((1, cip)),                            # phi
            wfull((cp, cip)), wfull((1, cip)),                            # g
            wfull((cip, cp)),                                             # W conv
            wfull((1, cp)), wfull((1, cp)),                               # BN scale/shift
        ],
        out_specs=pl.BlockSpec((1, tile, cp), lambda bi, qi, ki: (bi, qi, 0)),
        scratch_shapes=[
            pltpu.VMEM((tile, cip), jnp.float32),   # theta (per q-tile)
            pltpu.VMEM((tile, 1), jnp.float32),     # running max
            pltpu.VMEM((tile, 1), jnp.float32),     # running sum
            pltpu.VMEM((tile, cip), jnp.float32),   # output accumulator
        ],
        compiler_params=pltpu.CompilerParams(
            dimension_semantics=("parallel", "parallel", "arbitrary"),
            # Explicit scoped-VMEM budget with headroom; safe on v5e/v6e/v7x.
            vmem_limit_bytes=32 * 1024 * 1024,
        ),
        cost_estimate=pl.CostEstimate(
            flops=flops, transcendentals=transcendentals,
            bytes_accessed=bytes_accessed),
    )(x_bnc, x_bnc, w_th, b_th, w_ph, b_ph, w_g, b_g, w_w, scale, shift)

    out = out[:, :n, :c]                                   # strip padding
    return jnp.transpose(out, (0, 2, 1)).reshape(b, c, t, h, w)


def nonlocal_ref(x, p):
    """Pure-JAX reference mirroring the PyTorch forward exactly."""
    b, c, t, h, w = x.shape
    n = t * h * w
    xf = x.reshape(b, c, n)                                               # (B, C, N)

    def proj(wm, bv):
        return jnp.einsum("oc,bcn->bon", wm, xf) + bv.reshape(1, -1, 1)

    g_x = jnp.transpose(proj(p["w_g"], p["b_g"]), (0, 2, 1))              # (B, N, Ci)
    theta = jnp.transpose(proj(p["w_theta"], p["b_theta"]), (0, 2, 1))    # (B, N, Ci)
    phi = proj(p["w_phi"], p["b_phi"])                                    # (B, Ci, N)
    f = jnp.einsum("bnc,bcm->bnm", theta, phi)
    attn = jax.nn.softmax(f, axis=-1)
    y = jnp.einsum("bnm,bmc->bnc", attn, g_x)                             # (B, N, Ci)
    wy = jnp.einsum("oc,bnc->bno", p["w_W"], y) + p["b_W"].reshape(1, 1, -1)
    inv_std = jax.lax.rsqrt(p["bn_var"] + BN_EPS)
    bn = (wy - p["bn_mean"]) * inv_std * p["bn_gamma"] + p["bn_beta"]     # (B, N, C)
    bn = jnp.transpose(bn, (0, 2, 1)).reshape(b, c, t, h, w)
    return bn + x


def make_params(key, c, ci, zero_bn=True):
    ks = jax.random.split(key, 8)
    gamma = jnp.zeros((c,), jnp.float32) if zero_bn else jnp.ones((c,), jnp.float32)
    return {
        "w_theta": 0.2 * jax.random.normal(ks[0], (ci, c), jnp.float32),
        "b_theta": 0.1 * jax.random.normal(ks[1], (ci,), jnp.float32),
        "w_phi":   0.2 * jax.random.normal(ks[2], (ci, c), jnp.float32),
        "b_phi":   0.1 * jax.random.normal(ks[3], (ci,), jnp.float32),
        "w_g":     0.2 * jax.random.normal(ks[4], (ci, c), jnp.float32),
        "b_g":     0.1 * jax.random.normal(ks[5], (ci,), jnp.float32),
        "w_W":     0.2 * jax.random.normal(ks[6], (c, ci), jnp.float32),
        "b_W":     0.1 * jax.random.normal(ks[7], (c,), jnp.float32),
        # BatchNorm3d: module zero-initializes gamma/beta (bn_layer=True path);
        # running stats default to mean=0, var=1 (eval-mode semantics).
        "bn_gamma": gamma,
        "bn_beta":  jnp.zeros((c,), jnp.float32),
        "bn_mean":  jnp.zeros((c,), jnp.float32),
        "bn_var":   jnp.ones((c,), jnp.float32),
    }


if __name__ == "__main__":
    key = jax.random.PRNGKey(0)
    k_x, k_p = jax.random.split(key)

    # Small shapes consistent with the module: (b, c, t, h, w)
    B, C, T, H, W = 2, 4, 2, 4, 4
    CI = C // 2
    x = jax.random.normal(k_x, (B, C, T, H, W), jnp.float32)

    # 1) module-faithful init (BN gamma/beta = 0 -> W branch is zero, z == x)
    params0 = make_params(k_p, C, CI, zero_bn=True)
    z0 = jax.block_until_ready(nonlocal_block(x, params0))
    ref0 = nonlocal_ref(x, params0)
    np.testing.assert_allclose(np.asarray(z0), np.asarray(ref0), rtol=1e-4, atol=1e-4)

    # 2) gamma = 1 to exercise the full attention + W + folded-BN path
    params1 = make_params(k_p, C, CI, zero_bn=False)
    z1 = jax.block_until_ready(nonlocal_block(x, params1))
    ref1 = nonlocal_ref(x, params1)
    np.testing.assert_allclose(np.asarray(z1), np.asarray(ref1), rtol=1e-4, atol=1e-4)

    # 3) odd spatial extent + small q_tile -> exercises N padding, key masking
    #    and the multi-kv-tile online-softmax path.
    x2 = jax.random.normal(jax.random.PRNGKey(1), (B, C, 2, 3, 5), jnp.float32)
    z2 = jax.block_until_ready(nonlocal_block(x2, params1, q_tile=16))
    ref2 = nonlocal_ref(x2, params1)
    np.testing.assert_allclose(np.asarray(z2), np.asarray(ref2), rtol=1e-4, atol=1e-4)

    # 4) bf16 MXU operands with f32 accumulation (production fast path).
    z3 = jax.block_until_ready(
        nonlocal_block(x, params1, compute_dtype=jnp.bfloat16))
    np.testing.assert_allclose(np.asarray(z3), np.asarray(ref1), rtol=3e-2, atol=3e-2)

    print("KERNEL_OK")
</pallas_src>

<mosaic_0001>
module attributes {stable_mosaic.version = 11 : i64} {
  func.func @_nonlocal_kernel(%arg0: i32, %arg1: i32, %arg2: i32, %arg3: memref<1x32x128xf32, #tpu.memory_space<vmem>>, %arg4: memref<1x32x128xf32, #tpu.memory_space<vmem>>, %arg5: memref<128x128xf32, #tpu.memory_space<vmem>>, %arg6: memref<1x128xf32, #tpu.memory_space<vmem>>, %arg7: memref<128x128xf32, #tpu.memory_space<vmem>>, %arg8: memref<1x128xf32, #tpu.memory_space<vmem>>, %arg9: memref<128x128xf32, #tpu.memory_space<vmem>>, %arg10: memref<1x128xf32, #tpu.memory_space<vmem>>, %arg11: memref<128x128xf32, #tpu.memory_space<vmem>>, %arg12: memref<1x128xf32, #tpu.memory_space<vmem>>, %arg13: memref<1x128xf32, #tpu.memory_space<vmem>>, %arg14: memref<1x32x128xf32, #tpu.memory_space<vmem>>, %arg15: memref<32x128xf32, #tpu.memory_space<vmem>>, %arg16: memref<32x1xf32, #tpu.memory_space<vmem>>, %arg17: memref<32x1xf32, #tpu.memory_space<vmem>>, %arg18: memref<32x128xf32, #tpu.memory_space<vmem>>) attributes {dimension_semantics = [#tpu.dimension_semantics<parallel>, #tpu.dimension_semantics<parallel>, #tpu.dimension_semantics<arbitrary>], iteration_bounds = array<i64: 2, 1, 1>, scalar_prefetch = 0 : i64, scratch_operands = 4 : i64, tpu.core_type = #tpu.core_type<tc>, window_params = [{transform_indices = @transform_0, window_bounds = array<i64: 1, 32, 128>}, {transform_indices = @transform_1, window_bounds = array<i64: 1, 32, 128>}, {pipeline_mode = #tpu.pipeline_mode<synchronous>, transform_indices = @transform_2, window_bounds = array<i64: 128, 128>}, {pipeline_mode = #tpu.pipeline_mode<synchronous>, transform_indices = @transform_3, window_bounds = array<i64: 1, 128>}, {pipeline_mode = #tpu.pipeline_mode<synchronous>, transform_indices = @transform_4, window_bounds = array<i64: 128, 128>}, {pipeline_mode = #tpu.pipeline_mode<synchronous>, transform_indices = @transform_5, window_bounds = array<i64: 1, 128>}, {pipeline_mode = #tpu.pipeline_mode<synchronous>, transform_indices = @transform_6, window_bounds = array<i64: 128, 128>}, {pipeline_mode = #tpu.pipeline_mode<synchronous>, transform_indices = @transform_7, window_bounds = array<i64: 1, 128>}, {pipeline_mode = #tpu.pipeline_mode<synchronous>, transform_indices = @transform_8, window_bounds = array<i64: 128, 128>}, {pipeline_mode = #tpu.pipeline_mode<synchronous>, transform_indices = @transform_9, window_bounds = array<i64: 1, 128>}, {pipeline_mode = #tpu.pipeline_mode<synchronous>, transform_indices = @transform_10, window_bounds = array<i64: 1, 128>}, {transform_indices = @transform_11, window_bounds = array<i64: 1, 32, 128>}]} {
    %c0_i32 = arith.constant 0 : i32
    %0 = arith.cmpi eq, %arg2, %c0_i32 : i32
    %1 = arith.extui %0 : i1 to i32
    %c0_i32_0 = arith.constant 0 : i32
    %2 = arith.cmpi ne, %1, %c0_i32_0 : i32
    scf.if %2 {
      %c0_32 = arith.constant 0 : index
      %c0_33 = arith.constant 0 : index
      %c0_34 = arith.constant 0 : index
      %42 = vector.load %arg3[%c0_32, %c0_33, %c0_34] : memref<1x32x128xf32, #tpu.memory_space<vmem>>, vector<1x32x128xf32>
      %43 = vector.shape_cast %42 : vector<1x32x128xf32> to vector<32x128xf32>
      %c0_35 = arith.constant 0 : index
      %c0_36 = arith.constant 0 : index
      %44 = vector.load %arg5[%c0_35, %c0_36] : memref<128x128xf32, #tpu.memory_space<vmem>>, vector<128x128xf32>
      %cst_37 = arith.constant dense<0.000000e+00> : vector<32x128xf32>
      %45 = tpu.matmul %43, %44, %cst_37 {dimension_numbers = #tpu.dot_dimension_numbers<[1], [0], [0], [1], [0, 0, 1, 1], [], []>} : vector<32x128xf32>, vector<128x128xf32>, vector<32x128xf32> -> vector<32x128xf32>
      %c0_38 = arith.constant 0 : index
      %c0_39 = arith.constant 0 : index
      %46 = vector.load %arg6[%c0_38, %c0_39] : memref<1x128xf32, #tpu.memory_space<vmem>>, vector<1x128xf32>
      %47 = vector.broadcast %46 : vector<1x128xf32> to vector<32x128xf32>
      %48 = arith.addf %45, %47 : vector<32x128xf32>
      %c0_40 = arith.constant 0 : index
      %c0_41 = arith.constant 0 : index
      %49 = vector.load %arg15[%c0_40, %c0_41] : memref<32x128xf32, #tpu.memory_space<vmem>>, vector<32x128xf32>
      tpu.vector_store %arg15[%c0_40, %c0_41], %48 {strides = array<i32>} : memref<32x128xf32, #tpu.memory_space<vmem>>, vector<32x128xf32>,
      %cst_42 = arith.constant 0xFF800000 : f32
      %50 = vector.broadcast %cst_42 : f32 to vector<32x1xf32>
      %c0_43 = arith.constant 0 : index
      %c0_44 = arith.constant 0 : index
      %51 = vector.load %arg16[%c0_43, %c0_44] : memref<32x1xf32, #tpu.memory_space<vmem>>, vector<32x1xf32>
      tpu.vector_store %arg16[%c0_43, %c0_44], %50 {strides = array<i32>} : memref<32x1xf32, #tpu.memory_space<vmem>>, vector<32x1xf32>,
      %cst_45 = arith.constant 0.000000e+00 : f32
      %52 = vector.broadcast %cst_45 : f32 to vector<32x1xf32>
      %c0_46 = arith.constant 0 : index
      %c0_47 = arith.constant 0 : index
      %53 = vector.load %arg17[%c0_46, %c0_47] : memref<32x1xf32, #tpu.memory_space<vmem>>, vector<32x1xf32>
      tpu.vector_store %arg17[%c0_46, %c0_47], %52 {strides = array<i32>} : memref<32x1xf32, #tpu.memory_space<vmem>>, vector<32x1xf32>,
      %cst_48 = arith.constant 0.000000e+00 : f32
      %54 = vector.broadcast %cst_48 : f32 to vector<32x128xf32>
      %c0_49 = arith.constant 0 : index
      %c0_50 = arith.constant 0 : index
      %55 = vector.load %arg18[%c0_49, %c0_50] : memref<32x128xf32, #tpu.memory_space<vmem>>, vector<32x128xf32>
      tpu.vector_store %arg18[%c0_49, %c0_50], %54 {strides = array<i32>} : memref<32x128xf32, #tpu.memory_space<vmem>>, vector<32x128xf32>,
    } else {
    }
    %c0 = arith.constant 0 : index
    %c0_1 = arith.constant 0 : index
    %c0_2 = arith.constant 0 : index
    %3 = vector.load %arg4[%c0, %c0_1, %c0_2] : memref<1x32x128xf32, #tpu.memory_space<vmem>>, vector<1x32x128xf32>
    %4 = vector.shape_cast %3 : vector<1x32x128xf32> to vector<32x128xf32>
    %c0_3 = arith.constant 0 : index
    %c0_4 = arith.constant 0 : index
    %5 = vector.load %arg7[%c0_3, %c0_4] : memref<128x128xf32, #tpu.memory_space<vmem>>, vector<128x128xf32>
    %cst = arith.constant dense<0.000000e+00> : vector<32x128xf32>
    %6 = tpu.matmul %4, %5, %cst {dimension_numbers = #tpu.dot_dimension_numbers<[1], [0], [0], [1], [0, 0, 1, 1], [], []>} : vector<32x128xf32>, vector<128x128xf32>, vector<32x128xf32> -> vector<32x128xf32>
    %c0_5 = arith.constant 0 : index
    %c0_6 = arith.constant 0 : index
    %7 = vector.load %arg8[%c0_5, %c0_6] : memref<1x128xf32, #tpu.memory_space<vmem>>, vector<1x128xf32>
    %8 = vector.broadcast %7 : vector<1x128xf32> to vector<32x128xf32>
    %9 = arith.addf %6, %8 : vector<32x128xf32>
    %c0_7 = arith.constant 0 : index
    %c0_8 = arith.constant 0 : index
    %10 = vector.load %arg9[%c0_7, %c0_8] : memref<128x128xf32, #tpu.memory_space<vmem>>, vector<128x128xf32>
    %cst_9 = arith.constant dense<0.000000e+00> : vector<32x128xf32>
    %11 = tpu.matmul %4, %10, %cst_9 {dimension_numbers = #tpu.dot_dimension_numbers<[1], [0], [0], [1], [0, 0, 1, 1], [], []>} : vector<32x128xf32>, vector<128x128xf32>, vector<32x128xf32> -> vector<32x128xf32>
    %c0_10 = arith.constant 0 : index
    %c0_11 = arith.constant 0 : index
    %12 = vector.load %arg10[%c0_10, %c0_11] : memref<1x128xf32, #tpu.memory_space<vmem>>, vector<1x128xf32>
    %13 = vector.broadcast %12 : vector<1x128xf32> to vector<32x128xf32>
    %14 = arith.addf %11, %13 : vector<32x128xf32>
    %c0_12 = arith.constant 0 : index
    %c0_13 = arith.constant 0 : index
    %15 = vector.load %arg15[%c0_12, %c0_13] : memref<32x128xf32, #tpu.memory_space<vmem>>, vector<32x128xf32>
    %cst_14 = arith.constant dense<0.000000e+00> : vector<32x32xf32>
    %16 = tpu.matmul %15, %9, %cst_14 {dimension_numbers = #tpu.dot_dimension_numbers<[1], [1], [0], [0], [0, 0, 1, 0], [], []>} : vector<32x128xf32>, vector<32x128xf32>, vector<32x32xf32> -> vector<32x32xf32>
    %c0_15 = arith.constant 0 : index
    %c0_16 = arith.constant 0 : index
    %17 = vector.load %arg16[%c0_15, %c0_16] : memref<32x1xf32, #tpu.memory_space<vmem>>, vector<32x1xf32>
    %cst_17 = arith.constant dense<0xFF800000> : vector<32xf32>
    %18 = vector.multi_reduction <maximumf>, %16, %cst_17 [1] : vector<32x32xf32> to vector<32xf32>
    %19 = vector.shape_cast %18 : vector<32xf32> to vector<32x1xf32>
    %20 = arith.maximumf %17, %19 : vector<32x1xf32>
    %21 = arith.subf %17, %20 : vector<32x1xf32>
    %22 = math.exp %21 : vector<32x1xf32>
    %23 = vector.broadcast %20 : vector<32x1xf32> to vector<32x32xf32>
    %24 = arith.subf %16, %23 : vector<32x32xf32>
    %25 = math.exp %24 : vector<32x32xf32>
    %c0_18 = arith.constant 0 : index
    %c0_19 = arith.constant 0 : index
    %26 = vector.load %arg17[%c0_18, %c0_19] : memref<32x1xf32, #tpu.memory_space<vmem>>, vector<32x1xf32>
    %27 = arith.mulf %22, %26 : vector<32x1xf32>
    %cst_20 = arith.constant dense<0.000000e+00> : vector<32xf32>
    %28 = vector.multi_reduction <add>, %25, %cst_20 [1] : vector<32x32xf32> to vector<32xf32>
    %29 = vector.shape_cast %28 : vector<32xf32> to vector<32x1xf32>
    %30 = arith.addf %27, %29 : vector<32x1xf32>
    %c0_21 = arith.constant 0 : index
    %c0_22 = arith.constant 0 : index
    %31 = vector.load %arg17[%c0_21, %c0_22] : memref<32x1xf32, #tpu.memory_space<vmem>>, vector<32x1xf32>
    tpu.vector_store %arg17[%c0_21, %c0_22], %30 {strides = array<i32>} : memref<32x1xf32, #tpu.memory_space<vmem>>, vector<32x1xf32>,
    %c0_23 = arith.constant 0 : index
    %c0_24 = arith.constant 0 : index
    %32 = vector.load %arg18[%c0_23, %c0_24] : memref<32x128xf32, #tpu.memory_space<vmem>>, vector<32x128xf32>
    %33 = vector.broadcast %22 : vector<32x1xf32> to vector<32x128xf32>
    %34 = arith.mulf %33, %32 : vector<32x128xf32>
    %cst_25 = arith.constant dense<0.000000e+00> : vector<32x128xf32>
    %35 = tpu.matmul %25, %14, %cst_25 {dimension_numbers = #tpu.dot_dimension_numbers<[1], [0], [0], [1], [0, 0, 1, 1], [], []>} : vector<32x32xf32>, vector<32x128xf32>, vector<32x128xf32> -> vector<32x128xf32>
    %36 = arith.addf %34, %35 : vector<32x128xf32>
    %c0_26 = arith.constant 0 : index
    %c0_27 = arith.constant 0 : index
    %37 = vector.load %arg18[%c0_26, %c0_27] : memref<32x128xf32, #tpu.memory_space<vmem>>, vector<32x128xf32>
    tpu.vector_store %arg18[%c0_26, %c0_27], %36 {strides = array<i32>} : memref<32x128xf32, #tpu.memory_space<vmem>>, vector<32x128xf32>,
    %c0_28 = arith.constant 0 : index
    %c0_29 = arith.constant 0 : index
    %38 = vector.load %arg16[%c0_28, %c0_29] : memref<32x1xf32, #tpu.memory_space<vmem>>, vector<32x1xf32>
    tpu.vector_store %arg16[%c0_28, %c0_29], %20 {strides = array<i32>} : memref<32x1xf32, #tpu.memory_space<vmem>>, vector<32x1xf32>,
    %c0_i32_30 = arith.constant 0 : i32
    %39 = arith.cmpi eq, %arg2, %c0_i32_30 : i32
    %40 = arith.extui %39 : i1 to i32
    %c0_i32_31 = arith.constant 0 : i32
    %41 = arith.cmpi ne, %40, %c0_i32_31 : i32
    scf.if %41 {
      %c0_32 = arith.constant 0 : index
      %c0_33 = arith.constant 0 : index
      %42 = vector.load %arg17[%c0_32, %c0_33] : memref<32x1xf32, #tpu.memory_space<vmem>>, vector<32x1xf32>
      %43 = tpu.reciprocal %42 : vector<32x1xf32> -> vector<32x1xf32>
      %c0_34 = arith.constant 0 : index
      %c0_35 = arith.constant 0 : index
      %44 = vector.load %arg18[%c0_34, %c0_35] : memref<32x128xf32, #tpu.memory_space<vmem>>, vector<32x128xf32>
      %45 = vector.broadcast %43 : vector<32x1xf32> to vector<32x128xf32>
      %46 = arith.mulf %44, %45 : vector<32x128xf32>
      %c0_36 = arith.constant 0 : index
      %c0_37 = arith.constant 0 : index
      %47 = vector.load %arg11[%c0_36, %c0_37] : memref<128x128xf32, #tpu.memory_space<vmem>>, vector<128x128xf32>
      %cst_38 = arith.constant dense<0.000000e+00> : vector<32x128xf32>
      %48 = tpu.matmul %46, %47, %cst_38 {dimension_numbers = #tpu.dot_dimension_numbers<[1], [0], [0], [1], [0, 0, 1, 1], [], []>} : vector<32x128xf32>, vector<128x128xf32>, vector<32x128xf32> -> vector<32x128xf32>
      %c0_39 = arith.constant 0 : index
      %c0_40 = arith.constant 0 : index
      %49 = vector.load %arg12[%c0_39, %c0_40] : memref<1x128xf32, #tpu.memory_space<vmem>>, vector<1x128xf32>
      %50 = vector.broadcast %49 : vector<1x128xf32> to vector<32x128xf32>
      %51 = arith.mulf %48, %50 : vector<32x128xf32>
      %c0_41 = arith.constant 0 : index
      %c0_42 = arith.constant 0 : index
      %52 = vector.load %arg13[%c0_41, %c0_42] : memref<1x128xf32, #tpu.memory_space<vmem>>, vector<1x128xf32>
      %53 = vector.broadcast %52 : vector<1x128xf32> to vector<32x128xf32>
      %54 = arith.addf %51, %53 : vector<32x128xf32>
      %c0_43 = arith.constant 0 : index
      %c0_44 = arith.constant 0 : index
      %c0_45 = arith.constant 0 : index
      %55 = vector.load %arg3[%c0_43, %c0_44, %c0_45] : memref<1x32x128xf32, #tpu.memory_space<vmem>>, vector<1x32x128xf32>
      %56 = vector.shape_cast %55 : vector<1x32x128xf32> to vector<32x128xf32>
      %57 = arith.addf %54, %56 : vector<32x128xf32>
      %c0_46 = arith.constant 0 : index
      %c0_47 = arith.constant 0 : index
      %c0_48 = arith.constant 0 : index
      %58 = vector.load %arg14[%c0_46, %c0_47, %c0_48] : memref<1x32x128xf32, #tpu.memory_space<vmem>>, vector<1x32x128xf32>
      %59 = vector.shape_cast %58 : vector<1x32x128xf32> to vector<32x128xf32>
      %60 = vector.shape_cast %57 : vector<32x128xf32> to vector<1x32x128xf32>
      tpu.vector_store %arg14[%c0_46, %c0_47, %c0_48], %60 {strides = array<i32>} : memref<1x32x128xf32, #tpu.memory_space<vmem>>, vector<1x32x128xf32>,
    } else {
    }
    return
  }
  func.func @transform_0(%arg0: i32, %arg1: i32, %arg2: i32) -> (i32, i32, i32) {
    %c0_i32 = arith.constant 0 : i32
    %c0_i32_0 = arith.constant 0 : i32
    return %arg0, %arg1, %c0_i32 : i32, i32, i32
  }
  func.func @transform_1(%arg0: i32, %arg1: i32, %arg2: i32) -> (i32, i32, i32) {
    %c0_i32 = arith.constant 0 : i32
    %c0_i32_0 = arith.constant 0 : i32
    return %arg0, %arg2, %c0_i32 : i32, i32, i32
  }
  func.func @transform_2(%arg0: i32, %arg1: i32, %arg2: i32) -> (i32, i32) {
    %c0_i32 = arith.constant 0 : i32
    %c0_i32_0 = arith.constant 0 : i32
    %c0_i32_1 = arith.constant 0 : i32
    return %c0_i32, %c0_i32_0 : i32, i32
  }
  func.func @transform_3(%arg0: i32, %arg1: i32, %arg2: i32) -> (i32, i32) {
    %c0_i32 = arith.constant 0 : i32
    %c0_i32_0 = arith.constant 0 : i32
    %c0_i32_1 = arith.constant 0 : i32
    return %c0_i32, %c0_i32_0 : i32, i32
  }
  func.func @transform_4(%arg0: i32, %arg1: i32, %arg2: i32) -> (i32, i32) {
    %c0_i32 = arith.constant 0 : i32
    %c0_i32_0 = arith.constant 0 : i32
    %c0_i32_1 = arith.constant 0 : i32
    return %c0_i32, %c0_i32_0 : i32, i32
  }
  func.func @transform_5(%arg0: i32, %arg1: i32, %arg2: i32) -> (i32, i32) {
    %c0_i32 = arith.constant 0 : i32
    %c0_i32_0 = arith.constant 0 : i32
    %c0_i32_1 = arith.constant 0 : i32
    return %c0_i32, %c0_i32_0 : i32, i32
  }
  func.func @transform_6(%arg0: i32, %arg1: i32, %arg2: i32) -> (i32, i32) {
    %c0_i32 = arith.constant 0 : i32
    %c0_i32_0 = arith.constant 0 : i32
    %c0_i32_1 = arith.constant 0 : i32
    return %c0_i32, %c0_i32_0 : i32, i32
  }
  func.func @transform_7(%arg0: i32, %arg1: i32, %arg2: i32) -> (i32, i32) {
    %c0_i32 = arith.constant 0 : i32
    %c0_i32_0 = arith.constant 0 : i32
    %c0_i32_1 = arith.constant 0 : i32
    return %c0_i32, %c0_i32_0 : i32, i32
  }
  func.func @transform_8(%arg0: i32, %arg1: i32, %arg2: i32) -> (i32, i32) {
    %c0_i32 = arith.constant 0 : i32
    %c0_i32_0 = arith.constant 0 : i32
    %c0_i32_1 = arith.constant 0 : i32
    return %c0_i32, %c0_i32_0 : i32, i32
  }
  func.func @transform_9(%arg0: i32, %arg1: i32, %arg2: i32) -> (i32, i32) {
    %c0_i32 = arith.constant 0 : i32
    %c0_i32_0 = arith.constant 0 : i32
    %c0_i32_1 = arith.constant 0 : i32
    return %c0_i32, %c0_i32_0 : i32, i32
  }
  func.func @transform_10(%arg0: i32, %arg1: i32, %arg2: i32) -> (i32, i32) {
    %c0_i32 = arith.constant 0 : i32
    %c0_i32_0 = arith.constant 0 : i32
    %c0_i32_1 = arith.constant 0 : i32
    return %c0_i32, %c0_i32_0 : i32, i32
  }
  func.func @transform_11(%arg0: i32, %arg1: i32, %arg2: i32) -> (i32, i32, i32) {
    %c0_i32 = arith.constant 0 : i32
    %c0_i32_0 = arith.constant 0 : i32
    return %arg0, %arg1, %c0_i32 : i32, i32, i32
  }
}

</mosaic_0001>

<llo_original>
// kernel: tpu_custom_call.1
$region0: #{tpu_custom_call.1}
  #allocation0 [shape = 'u32[]', space=smem, size = 0x4, offset = 0x4, fixed_abs, tag = 'smem constant byte address 0x4 - core index']
  #allocation1 [shape = 'u32[144,128]{1,0:T(1,128)}', space=vmem, size = 0x12000, scoped, tag = 'internal scratch']
  #allocation2 [shape = 'f32[32,128]{1,0:T(8,128)}', space=vmem, size = 0x4000, scoped, tag = 'scratch operand']
  #allocation3 [shape = 'f32[32,1]{1,0:T(8,128)}', space=vmem, size = 0x4000, scoped, tag = 'scratch operand']
  #allocation4 [shape = 'f32[32,1]{1,0:T(8,128)}', space=vmem, size = 0x4000, scoped, tag = 'scratch operand']
  #allocation5 [shape = 'f32[32,128]{1,0:T(8,128)}', space=vmem, size = 0x4000, scoped, tag = 'scratch operand']
  %s0 = inlined_call_operand.hbm [shape: f32[2,32,128], index: 0, kind: input, shape index: {}]
  %s1 = inlined_call_operand.hbm [shape: f32[2,32,128], index: 1, kind: input, shape index: {}]
  %s2 = inlined_call_operand.hbm [shape: f32[128,128], index: 2, kind: input, shape index: {}]
  %s3 = inlined_call_operand.vmem [shape: f32[1,128], index: 3, kind: input, shape index: {}]
  %s4 = inlined_call_operand.hbm [shape: f32[128,128], index: 4, kind: input, shape index: {}]
  %s5 = inlined_call_operand.vmem [shape: f32[1,128], index: 5, kind: input, shape index: {}]
  %s6 = inlined_call_operand.hbm [shape: f32[128,128], index: 6, kind: input, shape index: {}]
  %s7 = inlined_call_operand.vmem [shape: f32[1,128], index: 7, kind: input, shape index: {}]
  %s8 = inlined_call_operand.hbm [shape: f32[128,128], index: 8, kind: input, shape index: {}]
  %s9 = inlined_call_operand.vmem [shape: f32[1,128], index: 9, kind: input, shape index: {}]
  %s10 = inlined_call_operand.vmem [shape: f32[1,128], index: 10, kind: input, shape index: {}]
  %s11 = inlined_call_operand.hbm [shape: f32[2,32,128], index: 11, kind: output, shape index: {}]
  %s12 = sld [smem:[#allocation0]]
  $region109: #{tpu_custom_call.1} parent=0
    _
  %s14 = ssub.s32 1, %s12
  %s15 = scalar_select 0, %s14, %s12
  $region1: #{tpu_custom_call.1} parent=0
    #allocation6 [shape = 'u8[32768]{0}', space=vmem, size = 0x8000, scoped, tag = 'input window, operand 0']
    #allocation7 [shape = 's32[2]{0}', space=sflag, size = 0x8, scoped, tag = 'scoped memory for tpu_custom_call.1']
    #allocation8 [shape = 's32[2]{0}', space=sflag, size = 0x8, scoped, tag = 'scoped memory for tpu_custom_call.1']
    #allocation9 [shape = 'u8[32768]{0}', space=vmem, size = 0x8000, scoped, tag = 'input window, operand 1']
    #allocation10 [shape = 's32[2]{0}', space=sflag, size = 0x8, scoped, tag = 'scoped memory for tpu_custom_call.1']
    #allocation11 [shape = 'u8[65536]{0}', space=vmem, size = 0x10000, scoped, tag = 'input window, operand 2, single buffered']
    #allocation12 [shape = 'u8[65536]{0}', space=vmem, size = 0x10000, scoped, tag = 'input window, operand 4, single buffered']
    #allocation13 [shape = 's32[1]{0}', space=sflag, size = 0x4, scoped, tag = 'scoped memory for tpu_custom_call.1']
    #allocation14 [shape = 'u8[65536]{0}', space=vmem, size = 0x10000, scoped, tag = 'input window, operand 6, single buffered']
    #allocation15 [shape = 'u8[65536]{0}', space=vmem, size = 0x10000, scoped, tag = 'input window, operand 8, single buffered']
    #allocation16 [shape = 's32[1]{0}', space=sflag, size = 0x4, scoped, tag = 'scoped memory for tpu_custom_call.1']
    #allocation17 [shape = 'u8[32768]{0}', space=vmem, size = 0x8000, scoped, tag = 'output window, operand 0']
    %16 = vsyncpa [#allocation7], 0
    %s17 = scalar_lea.sflag [#allocation7], 1
    %18 = vsyncpa %s17, 0
    %19 = vsyncpa [#allocation10], 0
    %s20 = scalar_lea.sflag [#allocation10], 1
    %21 = vsyncpa %s20, 0
    %22 = vsyncpa [#allocation13], 0
    %23 = vsyncpa [#allocation16], 0
    %24 = vsyncpa [#allocation8], 0
    %s25 = scalar_lea.sflag [#allocation8], 1
    %26 = vsyncpa %s25, 0
    loop: start=0, step=1, limit=4
    $region2: #{tpu_custom_call.1} parent=1 // loop_pre_header
      _
    $region3: #{tpu_custom_call.1} parent=1 // loop_header
      %s28 = sphi 0, %s32
      %p29 = scmp.ge.s32.totalorder %s28, 4
      %s35 = sphi 0, %s54
      %s36 = sphi 0, %s50
      %s37 = sphi 0, %s46
      %s38 = sphi 0, %s35
      %s39 = sphi 0, %s36
      %s40 = sphi 0, %s37
      %s41 = sphi 0, %s38
      %s42 = sphi 0, %s39
      %s43 = sphi 0, %s40
      %s59 = sphi 0, %s61
      %s62 = sphi 0, %s59
      %s63 = sphi 0, %s62
      %s79 = sphi 0, %s63
      %s87 = sphi 0, %s89
      %s90 = sphi 0, %s87
      %s91 = sphi 0, %s90
      %s107 = sphi 0, %s91
      %s111 = sphi 0, %s111
      %s113 = sphi 0, %s111
      %s114 = sphi 0, %s113
      %s128 = sphi 0, %s114
      %s132 = sphi 0, %s132
      %s134 = sphi 0, %s132
      %s135 = sphi 0, %s134
      %s149 = sphi 0, %s135
      %s153 = sphi 0, %s153
      %s155 = sphi 0, %s153
      %s156 = sphi 0, %s155
      %s170 = sphi 0, %s156
      %s174 = sphi 0, %s174
      %s176 = sphi 0, %s174
      %s177 = sphi 0, %s176
      %s191 = sphi 0, %s177
      %s195 = sphi 0, %s195
      %s197 = sphi 0, %s195
      %s198 = sphi 0, %s197
      %s212 = sphi 0, %s198
      %s216 = sphi 0, %s216
      %s218 = sphi 0, %s216
      %s219 = sphi 0, %s218
      %s233 = sphi 0, %s219
      %s237 = sphi 0, %s237
      %s239 = sphi 0, %s237
      %s240 = sphi 0, %s239
      %s254 = sphi 0, %s240
      %s258 = sphi 0, %s258
      %s260 = sphi 0, %s258
      %s261 = sphi 0, %s260
      %s275 = sphi 0, %s261
      %s279 = sphi 0, %s279
      %s281 = sphi 0, %s279
      %s282 = sphi 0, %s281
      %s296 = sphi 0, %s282
      %s304 = sphi 0, %s306
      %s307 = sphi 0, %s304
      %s308 = sphi 0, %s307
      %s324 = sphi 0, %s308
    $region4: #{tpu_custom_call.1} parent=1 // loop_header_branch
      %31 = sbr.rel (%p29) target = $region8
    $region5: #{tpu_custom_call.1} parent=1 // loop_body
      %s33 = ssub.s32 %s28, 1
      %s34 = ssub.s32 %s28, 2
      %s44 = sadd.s32 1, %s37
      %p45 = scmp.ge.s32.totalorder %s44, 1
      %s46 = scalar_select %p45, 0, %s44
      %s47 = sadd.s32 1, %s36
      %s48 = scalar_select %p45, %s47, %s36
      %p49 = scmp.ge.s32.totalorder %s48, 1
      %s50 = scalar_select %p49, 0, %s48
      %s51 = sadd.s32 1, %s35
      %s52 = scalar_select %p49, %s51, %s35
      %p53 = scmp.ge.s32.totalorder %s52, 2
      %s54 = scalar_select %p53, 0, %s52
      %s55 = ssub.s32 %s35, %s54
      %s56 = ssub.s32 %s36, %s50
      %s57 = sor.u32 %s55, %s56
      %p58 = scmp.eq.s32.totalorder %s57, 0
      %s60 = sadd.s32 %s59, 1
      %s61 = scalar_select %p58, %s59, %s60
      %p64 = pneg %p58
      %p65 = scmp.eq.s32.totalorder %s28, 1
      %p66 = por %p64, %p65
      %p67 = scmp.ne.s32.totalorder %s59, %s62
      %p68 = scmp.eq.s32.totalorder %s28, 0
      %p69 = por %p67, %p68
      %p70 = scmp.ne.s32.totalorder %s59, %s62
      %p71 = scmp.eq.s32.totalorder %s33, 1
      %p72 = por %p70, %p71
      %p73 = scmp.ne.s32.totalorder %s62, %s63
      %p74 = scmp.eq.s32.totalorder %s33, 0
      %p75 = por %p73, %p74
      %p76 = scmp.ne.s32.totalorder %s62, %s63
      %p77 = scmp.eq.s32.totalorder %s34, 1
      %p78 = por %p76, %p77
      %p80 = scmp.ne.s32.totalorder %s63, %s79
      %p81 = scmp.eq.s32.totalorder %s34, 0
      %p82 = por %p80, %p81
      %s83 = ssub.s32 %s35, %s54
      %s84 = ssub.s32 %s37, %s46
      %s85 = sor.u32 %s83, %s84
      %p86 = scmp.eq.s32.totalorder %s85, 0
      %s88 = sadd.s32 %s87, 1
      %s89 = scalar_select %p86, %s87, %s88
      %p92 = pneg %p86
      %p93 = scmp.eq.s32.totalorder %s28, 1
      %p94 = por %p92, %p93
      %p95 = scmp.ne.s32.totalorder %s87, %s90
      %p96 = scmp.eq.s32.totalorder %s28, 0
      %p97 = por %p95, %p96
      %p98 = scmp.ne.s32.totalorder %s87, %s90
      %p99 = scmp.eq.s32.totalorder %s33, 1
      %p100 = por %p98, %p99
      %p101 = scmp.ne.s32.totalorder %s90, %s91
      %p102 = scmp.eq.s32.totalorder %s33, 0
      %p103 = por %p101, %p102
      %p104 = scmp.ne.s32.totalorder %s90, %s91
      %p105 = scmp.eq.s32.totalorder %s34, 1
      %p106 = por %p104, %p105
      %p108 = scmp.ne.s32.totalorder %s91, %s107
      %p109 = scmp.eq.s32.totalorder %s34, 0
      %p110 = por %p108, %p109
      %s112 = sadd.s32 %s111, 1
      %p115 = scmp.eq.s32.totalorder %s28, 1
      %p116 = scmp.ne.s32.totalorder %s111, %s113
      %p117 = scmp.eq.s32.totalorder %s28, 0
      %p118 = por %p116, %p117
      %p119 = scmp.ne.s32.totalorder %s111, %s113
      %p120 = scmp.eq.s32.totalorder %s33, 1
      %p121 = por %p119, %p120
      %p122 = scmp.ne.s32.totalorder %s113, %s114
      %p123 = scmp.eq.s32.totalorder %s33, 0
      %p124 = por %p122, %p123
      %p125 = scmp.ne.s32.totalorder %s113, %s114
      %p126 = scmp.eq.s32.totalorder %s34, 1
      %p127 = por %p125, %p126
      %p129 = scmp.ne.s32.totalorder %s114, %s128
      %p130 = scmp.eq.s32.totalorder %s34, 0
      %p131 = por %p129, %p130
      %s133 = sadd.s32 %s132, 1
      %p136 = scmp.eq.s32.totalorder %s28, 1
      %p137 = scmp.ne.s32.totalorder %s132, %s134
      %p138 = scmp.eq.s32.totalorder %s28, 0
      %p139 = por %p137, %p138
      %p140 = scmp.ne.s32.totalorder %s132, %s134
      %p141 = scmp.eq.s32.totalorder %s33, 1
      %p142 = por %p140, %p141
      %p143 = scmp.ne.s32.totalorder %s134, %s135
      %p144 = scmp.eq.s32.totalorder %s33, 0
      %p145 = por %p143, %p144
      %p146 = scmp.ne.s32.totalorder %s134, %s135
      %p147 = scmp.eq.s32.totalorder %s34, 1
      %p148 = por %p146, %p147
      %p150 = scmp.ne.s32.totalorder %s135, %s149
      %p151 = scmp.eq.s32.totalorder %s34, 0
      %p152 = por %p150, %p151
      %s154 = sadd.s32 %s153, 1
      %p157 = scmp.eq.s32.totalorder %s28, 1
      %p158 = scmp.ne.s32.totalorder %s153, %s155
      %p159 = scmp.eq.s32.totalorder %s28, 0
      %p160 = por %p158, %p159
      %p161 = scmp.ne.s32.totalorder %s153, %s155
      %p162 = scmp.eq.s32.totalorder %s33, 1
      %p163 = por %p161, %p162
      %p164 = scmp.ne.s32.totalorder %s155, %s156
      %p165 = scmp.eq.s32.totalorder %s33, 0
      %p166 = por %p164, %p165
      %p167 = scmp.ne.s32.totalorder %s155, %s156
      %p168 = scmp.eq.s32.totalorder %s34, 1
      %p169 = por %p167, %p168
      %p171 = scmp.ne.s32.totalorder %s156, %s170
      %p172 = scmp.eq.s32.totalorder %s34, 0
      %p173 = por %p171, %p172
      %s175 = sadd.s32 %s174, 1
      %p178 = scmp.eq.s32.totalorder %s28, 1
      %p179 = scmp.ne.s32.totalorder %s174, %s176
      %p180 = scmp.eq.s32.totalorder %s28, 0
      %p181 = por %p179, %p180
      %p182 = scmp.ne.s32.totalorder %s174, %s176
      %p183 = scmp.eq.s32.totalorder %s33, 1
      %p184 = por %p182, %p183
      %p185 = scmp.ne.s32.totalorder %s176, %s177
      %p186 = scmp.eq.s32.totalorder %s33, 0
      %p187 = por %p185, %p186
      %p188 = scmp.ne.s32.totalorder %s176, %s177
      %p189 = scmp.eq.s32.totalorder %s34, 1
      %p190 = por %p188, %p189
      %p192 = scmp.ne.s32.totalorder %s177, %s191
      %p193 = scmp.eq.s32.totalorder %s34, 0
      %p194 = por %p192, %p193
      %s196 = sadd.s32 %s195, 1
      %p199 = scmp.eq.s32.totalorder %s28, 1
      %p200 = scmp.ne.s32.totalorder %s195, %s197
      %p201 = scmp.eq.s32.totalorder %s28, 0
      %p202 = por %p200, %p201
      %p203 = scmp.ne.s32.totalorder %s195, %s197
      %p204 = scmp.eq.s32.totalorder %s33, 1
      %p205 = por %p203, %p204
      %p206 = scmp.ne.s32.totalorder %s197, %s198
      %p207 = scmp.eq.s32.totalorder %s33, 0
      %p208 = por %p206, %p207
      %p209 = scmp.ne.s32.totalorder %s197, %s198
      %p210 = scmp.eq.s32.totalorder %s34, 1
      %p211 = por %p209, %p210
      %p213 = scmp.ne.s32.totalorder %s198, %s212
      %p214 = scmp.eq.s32.totalorder %s34, 0
      %p215 = por %p213, %p214
      %s217 = sadd.s32 %s216, 1
      %p220 = scmp.eq.s32.totalorder %s28, 1
      %p221 = scmp.ne.s32.totalorder %s216, %s218
      %p222 = scmp.eq.s32.totalorder %s28, 0
      %p223 = por %p221, %p222
      %p224 = scmp.ne.s32.totalorder %s216, %s218
      %p225 = scmp.eq.s32.totalorder %s33, 1
      %p226 = por %p224, %p225
      %p227 = scmp.ne.s32.totalorder %s218, %s219
      %p228 = scmp.eq.s32.totalorder %s33, 0
      %p229 = por %p227, %p228
      %p230 = scmp.ne.s32.totalorder %s218, %s219
      %p231 = scmp.eq.s32.totalorder %s34, 1
      %p232 = por %p230, %p231
      %p234 = scmp.ne.s32.totalorder %s219, %s233
      %p235 = scmp.eq.s32.totalorder %s34, 0
      %p236 = por %p234, %p235
      %s238 = sadd.s32 %s237, 1
      %p241 = scmp.eq.s32.totalorder %s28, 1
      %p242 = scmp.ne.s32.totalorder %s237, %s239
      %p243 = scmp.eq.s32.totalorder %s28, 0
      %p244 = por %p242, %p243
      %p245 = scmp.ne.s32.totalorder %s237, %s239
      %p246 = scmp.eq.s32.totalorder %s33, 1
      %p247 = por %p245, %p246
      %p248 = scmp.ne.s32.totalorder %s239, %s240
      %p249 = scmp.eq.s32.totalorder %s33, 0
      %p250 = por %p248, %p249
      %p251 = scmp.ne.s32.totalorder %s239, %s240
      %p252 = scmp.eq.s32.totalorder %s34, 1
      %p253 = por %p251, %p252
      %p255 = scmp.ne.s32.totalorder %s240, %s254
      %p256 = scmp.eq.s32.totalorder %s34, 0
      %p257 = por %p255, %p256
      %s259 = sadd.s32 %s258, 1
      %p262 = scmp.eq.s32.totalorder %s28, 1
      %p263 = scmp.ne.s32.totalorder %s258, %s260
      %p264 = scmp.eq.s32.totalorder %s28, 0
      %p265 = por %p263, %p264
      %p266 = scmp.ne.s32.totalorder %s258, %s260
      %p267 = scmp.eq.s32.totalorder %s33, 1
      %p268 = por %p266, %p267
      %p269 = scmp.ne.s32.totalorder %s260, %s261
      %p270 = scmp.eq.s32.totalorder %s33, 0
      %p271 = por %p269, %p270
      %p272 = scmp.ne.s32.totalorder %s260, %s261
      %p273 = scmp.eq.s32.totalorder %s34, 1
      %p274 = por %p272, %p273
      %p276 = scmp.ne.s32.totalorder %s261, %s275
      %p277 = scmp.eq.s32.totalorder %s34, 0
      %p278 = por %p276, %p277
      %s280 = sadd.s32 %s279, 1
      %p283 = scmp.eq.s32.totalorder %s28, 1
      %p284 = scmp.ne.s32.totalorder %s279, %s281
      %p285 = scmp.eq.s32.totalorder %s28, 0
      %p286 = por %p284, %p285
      %p287 = scmp.ne.s32.totalorder %s279, %s281
      %p288 = scmp.eq.s32.totalorder %s33, 1
      %p289 = por %p287, %p288
      %p290 = scmp.ne.s32.totalorder %s281, %s282
      %p291 = scmp.eq.s32.totalorder %s33, 0
      %p292 = por %p290, %p291
      %p293 = scmp.ne.s32.totalorder %s281, %s282
      %p294 = scmp.eq.s32.totalorder %s34, 1
      %p295 = por %p293, %p294
      %p297 = scmp.ne.s32.totalorder %s282, %s296
      %p298 = scmp.eq.s32.totalorder %s34, 0
      %p299 = por %p297, %p298
      %s300 = ssub.s32 %s35, %s54
      %s301 = ssub.s32 %s36, %s50
      %s302 = sor.u32 %s300, %s301
      %p303 = scmp.eq.s32.totalorder %s302, 0
      %s305 = sadd.s32 %s304, 1
      %s306 = scalar_select %p303, %s304, %s305
      %p309 = pneg %p303
      %p310 = scmp.eq.s32.totalorder %s28, 1
      %p311 = por %p309, %p310
      %p312 = scmp.ne.s32.totalorder %s304, %s307
      %p313 = scmp.eq.s32.totalorder %s28, 0
      %p314 = por %p312, %p313
      %p315 = scmp.ne.s32.totalorder %s304, %s307
      %p316 = scmp.eq.s32.totalorder %s33, 1
      %p317 = por %p315, %p316
      %p318 = scmp.ne.s32.totalorder %s307, %s308
      %p319 = scmp.eq.s32.totalorder %s33, 0
      %p320 = por %p318, %p319
      %p321 = scmp.ne.s32.totalorder %s307, %s308
      %p322 = scmp.eq.s32.totalorder %s34, 1
      %p323 = por %p321, %p322
      %p325 = scmp.ne.s32.totalorder %s308, %s324
      %p326 = scmp.eq.s32.totalorder %s34, 0
      %p327 = por %p325, %p326
      %p328 = scmp.le.s32.totalorder 1, %s28
      %p329 = scmp.lt.s32.totalorder %s28, 3
      %p330 = pnand %p328, %p329
      %p331 = pneg %p330
      // Predicated region
      $region9: #{tpu_custom_call.1} parent=5 // pred_check
        _
      $region10: #{tpu_custom_call.1} parent=5 // pred_check_branch
        %333 = sbr.rel (%p330) target = $region12
      $region11: #{tpu_custom_call.1} parent=5 // pred_region
        %s334 = ssub.s32 %s28, 1
        // Predicated region
        $region13: #{tpu_custom_call.1} parent=11 // pred_check
          %p335 = pneg %p124
        $region14: #{tpu_custom_call.1} parent=11 // pred_check_branch
          %337 = sbr.rel (%p335) target = $region16
        $region15: #{tpu_custom_call.1} parent=11 // pred_region
          %s339 = ssub.s32 2048, 2048
          %340 = vsyncadd [#allocation10], %s339
          %s341 = sshll.u32 [#allocation11], 4
          %s342 = int_to_ptr.vmem [resolvable:$true] %s341
          %347 = dma.hbm_to_vmem [thread:$0]  %s2, 2048, %s342, [#allocation10], 128, 128, 8
        $region16: #{tpu_custom_call.1} parent=11 // pred_fallthru
          _
        // Predicated region
        $region17: #{tpu_custom_call.1} parent=11 // pred_check
          %p348 = pneg %p145
        $region18: #{tpu_custom_call.1} parent=11 // pred_check_branch
          %350 = sbr.rel (%p348) target = $region20
        $region19: #{tpu_custom_call.1} parent=11 // pred_region
          _
        $region20: #{tpu_custom_call.1} parent=11 // pred_fallthru
          _
        // Predicated region
        $region21: #{tpu_custom_call.1} parent=11 // pred_check
          %p351 = pneg %p166
        $region22: #{tpu_custom_call.1} parent=11 // pred_check_branch
          %353 = sbr.rel (%p351) target = $region24
        $region23: #{tpu_custom_call.1} parent=11 // pred_region
          %s355 = ssub.s32 2048, 2048
          %356 = vsyncadd [#allocation13], %s355
          %s357 = sshll.u32 [#allocation12], 4
          %s358 = int_to_ptr.vmem [resolvable:$true] %s357
          %363 = dma.hbm_to_vmem [thread:$0]  %s4, 2048, %s358, [#allocation13], 128, 128, 8
        $region24: #{tpu_custom_call.1} parent=11 // pred_fallthru
          _
        // Predicated region
        $region25: #{tpu_custom_call.1} parent=11 // pred_check
          %p364 = pneg %p187
        $region26: #{tpu_custom_call.1} parent=11 // pred_check_branch
          %366 = sbr.rel (%p364) target = $region28
        $region27: #{tpu_custom_call.1} parent=11 // pred_region
          _
        $region28: #{tpu_custom_call.1} parent=11 // pred_fallthru
          _
        // Predicated region
        $region29: #{tpu_custom_call.1} parent=11 // pred_check
          %p367 = pneg %p208
        $region30: #{tpu_custom_call.1} parent=11 // pred_check_branch
          %369 = sbr.rel (%p367) target = $region32
        $region31: #{tpu_custom_call.1} parent=11 // pred_region
          %s371 = ssub.s32 2048, 2048
          %372 = vsyncadd [#allocation13], %s371
          %s373 = sshll.u32 [#allocation14], 4
          %s374 = int_to_ptr.vmem [resolvable:$true] %s373
          %379 = dma.hbm_to_vmem [thread:$0]  %s6, 2048, %s374, [#allocation13], 128, 128, 8
        $region32: #{tpu_custom_call.1} parent=11 // pred_fallthru
          _
        // Predicated region
        $region33: #{tpu_custom_call.1} parent=11 // pred_check
          %p380 = pneg %p229
        $region34: #{tpu_custom_call.1} parent=11 // pred_check_branch
          %382 = sbr.rel (%p380) target = $region36
        $region35: #{tpu_custom_call.1} parent=11 // pred_region
          _
        $region36: #{tpu_custom_call.1} parent=11 // pred_fallthru
          _
        // Predicated region
        $region37: #{tpu_custom_call.1} parent=11 // pred_check
          %p383 = pneg %p250
        $region38: #{tpu_custom_call.1} parent=11 // pred_check_branch
          %385 = sbr.rel (%p383) target = $region40
        $region39: #{tpu_custom_call.1} parent=11 // pred_region
          %s387 = ssub.s32 2048, 2048
          %388 = vsyncadd [#allocation16], %s387
          %s389 = sshll.u32 [#allocation15], 4
          %s390 = int_to_ptr.vmem [resolvable:$true] %s389
          %395 = dma.hbm_to_vmem [thread:$0]  %s8, 2048, %s390, [#allocation16], 128, 128, 8
        $region40: #{tpu_custom_call.1} parent=11 // pred_fallthru
          _
        // Predicated region
        $region41: #{tpu_custom_call.1} parent=11 // pred_check
          %p396 = pneg %p271
        $region42: #{tpu_custom_call.1} parent=11 // pred_check_branch
          %398 = sbr.rel (%p396) target = $region44
        $region43: #{tpu_custom_call.1} parent=11 // pred_region
          _
        $region44: #{tpu_custom_call.1} parent=11 // pred_fallthru
          _
        // Predicated region
        $region45: #{tpu_custom_call.1} parent=11 // pred_check
          %p399 = pneg %p292
        $region46: #{tpu_custom_call.1} parent=11 // pred_check_branch
          %401 = sbr.rel (%p399) target = $region48
        $region47: #{tpu_custom_call.1} parent=11 // pred_region
          _
        $region48: #{tpu_custom_call.1} parent=11 // pred_fallthru
          _
      $region12: #{tpu_custom_call.1} parent=5 // pred_fallthru
        _
      %p402 = scmp.lt.s32.totalorder %s28, 2
      // Predicated region
      $region49: #{tpu_custom_call.1} parent=5 // pred_check
        %p403 = pneg %p402
      $region50: #{tpu_custom_call.1} parent=5 // pred_check_branch
        %405 = sbr.rel (%p403) target = $region52
      $region51: #{tpu_custom_call.1} parent=5 // pred_region
        // Predicated region
        $region53: #{tpu_custom_call.1} parent=51 // pred_check
          %p406 = pneg %p69
        $region54: #{tpu_custom_call.1} parent=51 // pred_check_branch
          %408 = sbr.rel (%p406) target = $region56
        $region55: #{tpu_custom_call.1} parent=51 // pred_region
          %s409 = sand.u32 %s59, 1
          %s410 = scalar_lea.sflag [#allocation7], %s409
          %s411 = sand.u32 %s59, 1
          %s412 = smul.addr %s411, 32
          %s413 = scalar_lea.vmem [#allocation6], %s412
          %s414 = smul.u32 4, %s36
          %s416 = ssub.s32 512, 512
          %417 = vsyncadd %s410, %s416
          %s418 = smul.addr %s35, 4
          %s419 = sadd.s32 %s414, %s418
          %s420 = smul.addr %s419, 128
          %s421 = scalar_lea.hbm %s0, %s420
          %s422 = sshll.u32 %s413, 4
          %s423 = int_to_ptr.vmem [resolvable:$true] %s422
          %428 = dma.hbm_to_vmem [thread:$0]  %s421, 512, %s423, %s410, 128, 128, 8
        $region56: #{tpu_custom_call.1} parent=51 // pred_fallthru
          _
        // Predicated region
        $region57: #{tpu_custom_call.1} parent=51 // pred_check
          %p429 = pneg %p97
        $region58: #{tpu_custom_call.1} parent=51 // pred_check_branch
          %431 = sbr.rel (%p429) target = $region60
        $region59: #{tpu_custom_call.1} parent=51 // pred_region
          %s432 = sand.u32 %s28, 1
          %s433 = scalar_lea.sflag [#allocation10], %s432
          %s434 = sand.u32 %s87, 1
          %s435 = smul.addr %s434, 32
          %s436 = scalar_lea.vmem [#allocation9], %s435
          %s437 = smul.u32 4, %s37
          %s439 = ssub.s32 512, 512
          %440 = vsyncadd %s433, %s439
          %s441 = smul.addr %s35, 4
          %s442 = sadd.s32 %s437, %s441
          %s443 = smul.addr %s442, 128
          %s444 = scalar_lea.hbm %s1, %s443
          %s445 = sshll.u32 %s436, 4
          %s446 = int_to_ptr.vmem [resolvable:$true] %s445
          %451 = dma.hbm_to_vmem [thread:$0]  %s444, 512, %s446, %s433, 128, 128, 8
        $region60: #{tpu_custom_call.1} parent=51 // pred_fallthru
          _
      $region52: #{tpu_custom_call.1} parent=5 // pred_fallthru
        _
      %p452 = scmp.le.s32.totalorder 1, %s28
      %p453 = scmp.lt.s32.totalorder %s28, 3
      %p454 = pnand %p452, %p453
      %p455 = pneg %p454
      // Predicated region
      $region61: #{tpu_custom_call.1} parent=5 // pred_check
        _
      $region62: #{tpu_custom_call.1} parent=5 // pred_check_branch
        %457 = sbr.rel (%p454) target = $region64
      $region63: #{tpu_custom_call.1} parent=5 // pred_region
        %s458 = ssub.s32 %s28, 1
        %s459 = sand.u32 %s62, 1
        %s460 = scalar_lea.sflag [#allocation7], %s459
        %s461 = sand.u32 %s62, 1
        %s462 = smul.addr %s461, 32
        %s463 = scalar_lea.vmem [#allocation6], %s462
        // Predicated region
        $region65: #{tpu_custom_call.1} parent=63 // pred_check
          %p464 = pneg %p75
        $region66: #{tpu_custom_call.1} parent=63 // pred_check_branch
          %466 = sbr.rel (%p464) target = $region68
        $region67: #{tpu_custom_call.1} parent=63 // pred_region
          %467 = dma.done %s460, 512
        $region68: #{tpu_custom_call.1} parent=63 // pred_fallthru
          _
        %s468 = sand.u32 %s33, 1
        %s469 = scalar_lea.sflag [#allocation10], %s468
        %s470 = sand.u32 %s90, 1
        %s471 = smul.addr %s470, 32
        %s472 = scalar_lea.vmem [#allocation9], %s471
        // Predicated region
        $region69: #{tpu_custom_call.1} parent=63 // pred_check
          %p473 = pneg %p103
        $region70: #{tpu_custom_call.1} parent=63 // pred_check_branch
          %475 = sbr.rel (%p473) target = $region72
        $region71: #{tpu_custom_call.1} parent=63 // pred_region
          %476 = dma.done %s469, 512
        $region72: #{tpu_custom_call.1} parent=63 // pred_fallthru
          _
        // Predicated region
        $region73: #{tpu_custom_call.1} parent=63 // pred_check
          %p477 = pneg %p124
        $region74: #{tpu_custom_call.1} parent=63 // pred_check_branch
          %479 = sbr.rel (%p477) target = $region76
        $region75: #{tpu_custom_call.1} parent=63 // pred_region
          %480 = dma.done [#allocation10], 2048
        $region76: #{tpu_custom_call.1} parent=63 // pred_fallthru
          _
        // Predicated region
        $region77: #{tpu_custom_call.1} parent=63 // pred_check
          %p481 = pneg %p166
        $region78: #{tpu_custom_call.1} parent=63 // pred_check_branch
          %483 = sbr.rel (%p481) target = $region80
        $region79: #{tpu_custom_call.1} parent=63 // pred_region
          %484 = dma.done [#allocation13], 2048
        $region80: #{tpu_custom_call.1} parent=63 // pred_fallthru
          _
        // Predicated region
        $region81: #{tpu_custom_call.1} parent=63 // pred_check
          %p485 = pneg %p208
        $region82: #{tpu_custom_call.1} parent=63 // pred_check_branch
          %487 = sbr.rel (%p485) target = $region84
        $region83: #{tpu_custom_call.1} parent=63 // pred_region
          %488 = dma.done [#allocation13], 2048
        $region84: #{tpu_custom_call.1} parent=63 // pred_fallthru
          _
        // Predicated region
        $region85: #{tpu_custom_call.1} parent=63 // pred_check
          %p489 = pneg %p250
        $region86: #{tpu_custom_call.1} parent=63 // pred_check_branch
          %491 = sbr.rel (%p489) target = $region88
        $region87: #{tpu_custom_call.1} parent=63 // pred_region
          %492 = dma.done [#allocation16], 2048
        $region88: #{tpu_custom_call.1} parent=63 // pred_fallthru
          _
        %s493 = sand.u32 %s62, 1
        %s494 = scalar_lea.sflag [#allocation7], %s493
        %s495 = sand.u32 %s62, 1
        %s496 = smul.addr %s495, 32
        %s497 = scalar_lea.vmem [#allocation6], %s496
        %p498 = pneg %p75
        %p499 = pneg %p72
        %s500 = sand.u32 %s33, 1
        %s501 = scalar_lea.sflag [#allocation10], %s500
        %s502 = sand.u32 %s90, 1
        %s503 = smul.addr %s502, 32
        %s504 = scalar_lea.vmem [#allocation9], %s503
        %p505 = pneg %p103
        %p506 = pneg %p100
        %p507 = pneg %p124
        %p508 = pneg %p121
        %p509 = pneg %p145
        %p510 = pneg %p142
        %p511 = pneg %p166
        %p512 = pneg %p163
        %p513 = pneg %p187
        %p514 = pneg %p184
        %p515 = pneg %p208
        %p516 = pneg %p205
        %p517 = pneg %p229
        %p518 = pneg %p226
        %p519 = pneg %p250
        %p520 = pneg %p247
        %p521 = pneg %p271
        %p522 = pneg %p268
        %p523 = pneg %p292
        %p524 = pneg %p289
        %p525 = pneg %p320
        %p526 = pneg %p317
        %s527 = sand.u32 %s307, 1
        %s528 = scalar_lea.sflag [#allocation8], %s527
        %s529 = sand.u32 %s307, 1
        %s530 = smul.addr %s529, 32
        %s531 = scalar_lea.vmem [#allocation17], %s530
        %s532 = smul.u32 4, %s39
        %s533 = smul.u32 4, %s40
        %s534 = smul.u32 4, %s39
        %p535 = scmp.eq.s32.totalorder %s40, 0
        // Predicated region
        $region89: #{tpu_custom_call.1} parent=63 // pred_check
          %p536 = pneg %p535
        $region90: #{tpu_custom_call.1} parent=63 // pred_check_branch
          %538 = sbr.rel (%p536) target = $region92
        $region91: #{tpu_custom_call.1} parent=63 // pred_region
          %v539 = vld [vmem:[%s463] sm:$0xff]
          %v540 = vld [vmem:[%s463 + $0x8] sm:$0xff]
          %v541 = vld [vmem:[%s463 + $0x10] sm:$0xff]
          %v542 = vld [vmem:[%s463 + $0x18] sm:$0xff]
          %v543 = vld [vmem:[#allocation11] sm:$0xff]
          %v544 = vld [vmem:[#allocation11 + $0x8] sm:$0xff]
          %v545 = vld [vmem:[#allocation11 + $0x10] sm:$0xff]
          %v546 = vld [vmem:[#allocation11 + $0x18] sm:$0xff]
          %v547 = vld [vmem:[#allocation11 + $0x20] sm:$0xff]
          %v548 = vld [vmem:[#allocation11 + $0x28] sm:$0xff]
          %v549 = vld [vmem:[#allocation11 + $0x30] sm:$0xff]
          %v550 = vld [vmem:[#allocation11 + $0x38] sm:$0xff]
          %v551 = vld [vmem:[#allocation11 + $0x40] sm:$0xff]
          %v552 = vld [vmem:[#allocation11 + $0x48] sm:$0xff]
          %v553 = vld [vmem:[#allocation11 + $0x50] sm:$0xff]
          %v554 = vld [vmem:[#allocation11 + $0x58] sm:$0xff]
          %v555 = vld [vmem:[#allocation11 + $0x60] sm:$0xff]
          %v556 = vld [vmem:[#allocation11 + $0x68] sm:$0xff]
          %v557 = vld [vmem:[#allocation11 + $0x70] sm:$0xff]
          %v558 = vld [vmem:[#allocation11 + $0x78] sm:$0xff]
          %v559 = vld [vmem:[%s3] sm:$0x1]
          %v561 = vlaneseq
          %v562 = vshrl.u32 %v561, 7
          %v563 = vsub.s32 0, %v562
          %v564 = vrot.slane %v559, %v563
          %566 = vmatprep.subr.mxu0 0.0
          %567 = vmatpush1.msra.mxu0 %v558
          %568 = vmatprep.subr.mxu0 0.0
          %569 = vmatpush1.msra.mxu0 %v557
          %570 = vmatprep.subr.mxu0 0.0
          %571 = vmatpush1.msra.mxu0 %v556
          %572 = vmatprep.subr.mxu0 0.0
          %573 = vmatpush1.msra.mxu0 %v555
          %574 = vmatprep.subr.mxu0 0.0
          %575 = vmatpush1.msra.mxu0 %v554
          %576 = vmatprep.subr.mxu0 0.0
          %577 = vmatpush1.msra.mxu0 %v553
          %578 = vmatprep.subr.mxu0 0.0
          %579 = vmatpush1.msra.mxu0 %v552
          %580 = vmatprep.subr.mxu0 0.0
          %581 = vmatpush1.msra.mxu0 %v551
          %582 = vmatprep.subr.mxu0 0.0
          %583 = vmatpush1.msra.mxu0 %v550
          %584 = vmatprep.subr.mxu0 0.0
          %585 = vmatpush1.msra.mxu0 %v549
          %586 = vmatprep.subr.mxu0 0.0
          %587 = vmatpush1.msra.mxu0 %v548
          %588 = vmatprep.subr.mxu0 0.0
          %589 = vmatpush1.msra.mxu0 %v547
          %590 = vmatprep.subr.mxu0 0.0
          %591 = vmatpush1.msra.mxu0 %v546
          %592 = vmatprep.subr.mxu0 0.0
          %593 = vmatpush1.msra.mxu0 %v545
          %594 = vmatprep.subr.mxu0 0.0
          %595 = vmatpush1.msra.mxu0 %v544
          %596 = vmatprep.subr.mxu0 0.0
          %597 = vmatpush1.msra.mxu0 %v543
          %598 = vmatprep.subr.mxu0 0.0
          %599 = vmatpush2.msra.mxu0 0.0
          %600 = vmatprep.subr.mxu0 0.0
          %601 = vmatpush2.msra.mxu0 0.0
          %602 = vmatprep.subr.mxu0 0.0
          %603 = vmatpush2.msra.mxu0 0.0
          %604 = vmatprep.subr.mxu0 0.0
          %605 = vmatpush2.msra.mxu0 0.0
          %606 = vmatprep.subr.mxu0 0.0
          %607 = vmatpush2.msra.mxu0 0.0
          %608 = vmatprep.subr.mxu0 0.0
          %609 = vmatpush2.msra.mxu0 0.0
          %610 = vmatprep.subr.mxu0 0.0
          %611 = vmatpush2.msra.mxu0 0.0
          %612 = vmatprep.subr.mxu0 0.0
          %613 = vmatpush2.msra.mxu0 0.0
          %614 = vmatprep.subr.mxu0 0.0
          %615 = vmatpush2.msra.mxu0 0.0
          %616 = vmatprep.subr.mxu0 0.0
          %617 = vmatpush2.msra.mxu0 0.0
          %618 = vmatprep.subr.mxu0 0.0
          %619 = vmatpush2.msra.mxu0 0.0
          %620 = vmatprep.subr.mxu0 0.0
          %621 = vmatpush2.msra.mxu0 0.0
          %622 = vmatprep.subr.mxu0 0.0
          %623 = vmatpush2.msra.mxu0 0.0
          %624 = vmatprep.subr.mxu0 0.0
          %625 = vmatpush2.msra.mxu0 0.0
          %626 = vmatprep.subr.mxu0 0.0
          %627 = vmatpush2.msra.mxu0 0.0
          %628 = vmatprep.subr.mxu0 0.0
          %629 = vmatpush2.msra.mxu0 0.0
          %630 = vmatprep.mubr.f32.mxu0 0.0
          %631 = vmatmul.mubr.f32.gmra.mxu0 %v539
          %v632 = vpop.f32.mrf.mxu0
          %v633 = vadd.f32 %v564, %v632
          %v634 = vpop.f32.mrf.mxu0
          %635 = vmatprep.mubr.f32.mxu0 0.0
          %636 = vmatmul.mubr.f32.gmra.mxu0 %v540
          %v637 = vpop.f32.mrf.mxu0
          %v638 = vadd.f32 %v564, %v637
          %v639 = vpop.f32.mrf.mxu0
          %640 = vmatprep.mubr.f32.mxu0 0.0
          %641 = vmatmul.mubr.f32.gmra.mxu0 %v541
          %v642 = vpop.f32.mrf.mxu0
          %v643 = vadd.f32 %v564, %v642
          %v644 = vpop.f32.mrf.mxu0
          %645 = vmatprep.mubr.f32.mxu0 0.0
          %646 = vmatmul.mubr.f32.gmra.mxu0 %v542
          %v647 = vpop.f32.mrf.mxu0
          %v648 = vadd.f32 %v564, %v647
          %v649 = vpop.f32.mrf.mxu0
          %650 = vdwg.mxu0
          %651 = vst [vmem:[#allocation2] sm:$0xff] %v633
          %652 = vst [vmem:[#allocation2 + $0x8] sm:$0xff] %v638
          %653 = vst [vmem:[#allocation2 + $0x10] sm:$0xff] %v643
          %654 = vst [vmem:[#allocation2 + $0x18] sm:$0xff] %v648
          %vm655 = vcmask 7168
          %656 = vst.msk [vmem:[#allocation3] sm:$0xff] %vm655, -inf
          %657 = vst.msk [vmem:[#allocation3 + $0x8] sm:$0xff] %vm655, -inf
          %658 = vst.msk [vmem:[#allocation3 + $0x10] sm:$0xff] %vm655, -inf
          %659 = vst.msk [vmem:[#allocation3 + $0x18] sm:$0xff] %vm655, -inf
          %660 = vst.msk [vmem:[#allocation4] sm:$0xff] %vm655, 0.0
          %661 = vst.msk [vmem:[#allocation4 + $0x8] sm:$0xff] %vm655, 0.0
          %662 = vst.msk [vmem:[#allocation4 + $0x10] sm:$0xff] %vm655, 0.0
          %663 = vst.msk [vmem:[#allocation4 + $0x18] sm:$0xff] %vm655, 0.0
          %664 = vst [vmem:[#allocation5] sm:$0xff] 0.0
          %665 = vst [vmem:[#allocation5 + $0x8] sm:$0xff] 0.0
          %666 = vst [vmem:[#allocation5 + $0x10] sm:$0xff] 0.0
          %667 = vst [vmem:[#allocation5 + $0x18] sm:$0xff] 0.0
        $region92: #{tpu_custom_call.1} parent=63 // pred_fallthru
          _
        %v668 = vld [vmem:[%s472] sm:$0xff]
        %v669 = vld [vmem:[%s472 + $0x8] sm:$0xff]
        %v670 = vld [vmem:[%s472 + $0x10] sm:$0xff]
        %v671 = vld [vmem:[%s472 + $0x18] sm:$0xff]
        %v672 = vld [vmem:[#allocation12] sm:$0xff]
        %v673 = vld [vmem:[#allocation12 + $0x8] sm:$0xff]
        %v674 = vld [vmem:[#allocation12 + $0x10] sm:$0xff]
        %v675 = vld [vmem:[#allocation12 + $0x18] sm:$0xff]
        %v676 = vld [vmem:[#allocation12 + $0x20] sm:$0xff]
        %v677 = vld [vmem:[#allocation12 + $0x28] sm:$0xff]
        %v678 = vld [vmem:[#allocation12 + $0x30] sm:$0xff]
        %v679 = vld [vmem:[#allocation12 + $0x38] sm:$0xff]
        %v680 = vld [vmem:[#allocation12 + $0x40] sm:$0xff]
        %v681 = vld [vmem:[#allocation12 + $0x48] sm:$0xff]
        %v682 = vld [vmem:[#allocation12 + $0x50] sm:$0xff]
        %v683 = vld [vmem:[#allocation12 + $0x58] sm:$0xff]
        %v684 = vld [vmem:[#allocation12 + $0x60] sm:$0xff]
        %v685 = vld [vmem:[#allocation12 + $0x68] sm:$0xff]
        %v686 = vld [vmem:[#allocation12 + $0x70] sm:$0xff]
        %v687 = vld [vmem:[#allocation12 + $0x78] sm:$0xff]
        %v688 = vld [vmem:[%s5] sm:$0x1]
        %v690 = vlaneseq
        %v691 = vshrl.u32 %v690, 7
        %v692 = vsub.s32 0, %v691
        %v693 = vrot.slane %v688, %v692
        %695 = vmatprep.subr.mxu0 0.0
        %696 = vmatpush1.msra.mxu0 %v687
        %697 = vmatprep.subr.mxu0 0.0
        %698 = vmatpush1.msra.mxu0 %v686
        %699 = vmatprep.subr.mxu0 0.0
        %700 = vmatpush1.msra.mxu0 %v685
        %701 = vmatprep.subr.mxu0 0.0
        %702 = vmatpush1.msra.mxu0 %v684
        %703 = vmatprep.subr.mxu0 0.0
        %704 = vmatpush1.msra.mxu0 %v683
        %705 = vmatprep.subr.mxu0 0.0
        %706 = vmatpush1.msra.mxu0 %v682
        %707 = vmatprep.subr.mxu0 0.0
        %708 = vmatpush1.msra.mxu0 %v681
        %709 = vmatprep.subr.mxu0 0.0
        %710 = vmatpush1.msra.mxu0 %v680
        %711 = vmatprep.subr.mxu0 0.0
        %712 = vmatpush1.msra.mxu0 %v679
        %713 = vmatprep.subr.mxu0 0.0
        %714 = vmatpush1.msra.mxu0 %v678
        %715 = vmatprep.subr.mxu0 0.0
        %716 = vmatpush1.msra.mxu0 %v677
        %717 = vmatprep.subr.mxu0 0.0
        %718 = vmatpush1.msra.mxu0 %v676
        %719 = vmatprep.subr.mxu0 0.0
        %720 = vmatpush1.msra.mxu0 %v675
        %721 = vmatprep.subr.mxu0 0.0
        %722 = vmatpush1.msra.mxu0 %v674
        %723 = vmatprep.subr.mxu0 0.0
        %724 = vmatpush1.msra.mxu0 %v673
        %725 = vmatprep.subr.mxu0 0.0
        %726 = vmatpush1.msra.mxu0 %v672
        %727 = vmatprep.subr.mxu0 0.0
        %728 = vmatpush2.msra.mxu0 0.0
        %729 = vmatprep.subr.mxu0 0.0
        %730 = vmatpush2.msra.mxu0 0.0
        %731 = vmatprep.subr.mxu0 0.0
        %732 = vmatpush2.msra.mxu0 0.0
        %733 = vmatprep.subr.mxu0 0.0
        %734 = vmatpush2.msra.mxu0 0.0
        %735 = vmatprep.subr.mxu0 0.0
        %736 = vmatpush2.msra.mxu0 0.0
        %737 = vmatprep.subr.mxu0 0.0
        %738 = vmatpush2.msra.mxu0 0.0
        %739 = vmatprep.subr.mxu0 0.0
        %740 = vmatpush2.msra.mxu0 0.0
        %741 = vmatprep.subr.mxu0 0.0
        %742 = vmatpush2.msra.mxu0 0.0
        %743 = vmatprep.subr.mxu0 0.0
        %744 = vmatpush2.msra.mxu0 0.0
        %745 = vmatprep.subr.mxu0 0.0
        %746 = vmatpush2.msra.mxu0 0.0
        %747 = vmatprep.subr.mxu0 0.0
        %748 = vmatpush2.msra.mxu0 0.0
        %749 = vmatprep.subr.mxu0 0.0
        %750 = vmatpush2.msra.mxu0 0.0
        %751 = vmatprep.subr.mxu0 0.0
        %752 = vmatpush2.msra.mxu0 0.0
        %753 = vmatprep.subr.mxu0 0.0
        %754 = vmatpush2.msra.mxu0 0.0
        %755 = vmatprep.subr.mxu0 0.0
        %756 = vmatpush2.msra.mxu0 0.0
        %757 = vmatprep.subr.mxu0 0.0
        %758 = vmatpush2.msra.mxu0 0.0
        %759 = vmatprep.mubr.f32.mxu0 0.0
        %760 = vmatmul.mubr.f32.gmra.mxu0 %v668
        %v761 = vpop.f32.mrf.mxu0
        %v762 = vadd.f32 %v693, %v761
        %v763 = vpop.f32.mrf.mxu0
        %764 = vmatprep.mubr.f32.mxu0 0.0
        %765 = vmatmul.mubr.f32.gmra.mxu0 %v669
        %v766 = vpop.f32.mrf.mxu0
        %v767 = vadd.f32 %v693, %v766
        %v768 = vpop.f32.mrf.mxu0
        %769 = vmatprep.mubr.f32.mxu0 0.0
        %770 = vmatmul.mubr.f32.gmra.mxu0 %v670
        %v771 = vpop.f32.mrf.mxu0
        %v772 = vadd.f32 %v693, %v771
        %v773 = vpop.f32.mrf.mxu0
        %774 = vmatprep.mubr.f32.mxu0 0.0
        %775 = vmatmul.mubr.f32.gmra.mxu0 %v671
        %v776 = vpop.f32.mrf.mxu0
        %v777 = vadd.f32 %v693, %v776
        %v778 = vpop.f32.mrf.mxu0
        %779 = vdwg.mxu0
        %v780 = vld [vmem:[#allocation14] sm:$0xff]
        %v781 = vld [vmem:[#allocation14 + $0x8] sm:$0xff]
        %v782 = vld [vmem:[#allocation14 + $0x10] sm:$0xff]
        %v783 = vld [vmem:[#allocation14 + $0x18] sm:$0xff]
        %v784 = vld [vmem:[#allocation14 + $0x20] sm:$0xff]
        %v785 = vld [vmem:[#allocation14 + $0x28] sm:$0xff]
        %v786 = vld [vmem:[#allocation14 + $0x30] sm:$0xff]
        %v787 = vld [vmem:[#allocation14 + $0x38] sm:$0xff]
        %v788 = vld [vmem:[#allocation14 + $0x40] sm:$0xff]
        %v789 = vld [vmem:[#allocation14 + $0x48] sm:$0xff]
        %v790 = vld [vmem:[#allocation14 + $0x50] sm:$0xff]
        %v791 = vld [vmem:[#allocation14 + $0x58] sm:$0xff]
        %v792 = vld [vmem:[#allocation14 + $0x60] sm:$0xff]
        %v793 = vld [vmem:[#allocation14 + $0x68] sm:$0xff]
        %v794 = vld [vmem:[#allocation14 + $0x70] sm:$0xff]
        %v795 = vld [vmem:[#allocation14 + $0x78] sm:$0xff]
        %v796 = vld [vmem:[%s7] sm:$0x1]
        %v798 = vlaneseq
        %v799 = vshrl.u32 %v798, 7
        %v800 = vsub.s32 0, %v799
        %v801 = vrot.slane %v796, %v800
        %803 = vmatprep.subr.mxu0 0.0
        %804 = vmatpush1.msra.mxu0 %v795
        %805 = vmatprep.subr.mxu0 0.0
        %806 = vmatpush1.msra.mxu0 %v794
        %807 = vmatprep.subr.mxu0 0.0
        %808 = vmatpush1.msra.mxu0 %v793
        %809 = vmatprep.subr.mxu0 0.0
        %810 = vmatpush1.msra.mxu0 %v792
        %811 = vmatprep.subr.mxu0 0.0
        %812 = vmatpush1.msra.mxu0 %v791
        %813 = vmatprep.subr.mxu0 0.0
        %814 = vmatpush1.msra.mxu0 %v790
        %815 = vmatprep.subr.mxu0 0.0
        %816 = vmatpush1.msra.mxu0 %v789
        %817 = vmatprep.subr.mxu0 0.0
        %818 = vmatpush1.msra.mxu0 %v788
        %819 = vmatprep.subr.mxu0 0.0
        %820 = vmatpush1.msra.mxu0 %v787
        %821 = vmatprep.subr.mxu0 0.0
        %822 = vmatpush1.msra.mxu0 %v786
        %823 = vmatprep.subr.mxu0 0.0
        %824 = vmatpush1.msra.mxu0 %v785
        %825 = vmatprep.subr.mxu0 0.0
        %826 = vmatpush1.msra.mxu0 %v784
        %827 = vmatprep.subr.mxu0 0.0
        %828 = vmatpush1.msra.mxu0 %v783
        %829 = vmatprep.subr.mxu0 0.0
        %830 = vmatpush1.msra.mxu0 %v782
        %831 = vmatprep.subr.mxu0 0.0
        %832 = vmatpush1.msra.mxu0 %v781
        %833 = vmatprep.subr.mxu0 0.0
        %834 = vmatpush1.msra.mxu0 %v780
        %835 = vmatprep.subr.mxu0 0.0
        %836 = vmatpush2.msra.mxu0 0.0
        %837 = vmatprep.subr.mxu0 0.0
        %838 = vmatpush2.msra.mxu0 0.0
        %839 = vmatprep.subr.mxu0 0.0
        %840 = vmatpush2.msra.mxu0 0.0
        %841 = vmatprep.subr.mxu0 0.0
        %842 = vmatpush2.msra.mxu0 0.0
        %843 = vmatprep.subr.mxu0 0.0
        %844 = vmatpush2.msra.mxu0 0.0
        %845 = vmatprep.subr.mxu0 0.0
        %846 = vmatpush2.msra.mxu0 0.0
        %847 = vmatprep.subr.mxu0 0.0
        %848 = vmatpush2.msra.mxu0 0.0
        %849 = vmatprep.subr.mxu0 0.0
        %850 = vmatpush2.msra.mxu0 0.0
        %851 = vmatprep.subr.mxu0 0.0
        %852 = vmatpush2.msra.mxu0 0.0
        %853 = vmatprep.subr.mxu0 0.0
        %854 = vmatpush2.msra.mxu0 0.0
        %855 = vmatprep.subr.mxu0 0.0
        %856 = vmatpush2.msra.mxu0 0.0
        %857 = vmatprep.subr.mxu0 0.0
        %858 = vmatpush2.msra.mxu0 0.0
        %859 = vmatprep.subr.mxu0 0.0
        %860 = vmatpush2.msra.mxu0 0.0
        %861 = vmatprep.subr.mxu0 0.0
        %862 = vmatpush2.msra.mxu0 0.0
        %863 = vmatprep.subr.mxu0 0.0
        %864 = vmatpush2.msra.mxu0 0.0
        %865 = vmatprep.subr.mxu0 0.0
        %866 = vmatpush2.msra.mxu0 0.0
        %867 = vmatprep.mubr.f32.mxu0 0.0
        %868 = vmatmul.mubr.f32.gmra.mxu0 %v668
        %v869 = vpop.f32.mrf.mxu0
        %v870 = vadd.f32 %v801, %v869
        %v871 = vpop.f32.mrf.mxu0
        %872 = vmatprep.mubr.f32.mxu0 0.0
        %873 = vmatmul.mubr.f32.gmra.mxu0 %v669
        %v874 = vpop.f32.mrf.mxu0
        %v875 = vadd.f32 %v801, %v874
        %v876 = vpop.f32.mrf.mxu0
        %877 = vmatprep.mubr.f32.mxu0 0.0
        %878 = vmatmul.mubr.f32.gmra.mxu0 %v670
        %v879 = vpop.f32.mrf.mxu0
        %v880 = vadd.f32 %v801, %v879
        %v881 = vpop.f32.mrf.mxu0
        %882 = vmatprep.mubr.f32.mxu0 0.0
        %883 = vmatmul.mubr.f32.gmra.mxu0 %v671
        %v884 = vpop.f32.mrf.mxu0
        %v885 = vadd.f32 %v801, %v884
        %v886 = vpop.f32.mrf.mxu0
        %887 = vdwg.mxu0
        %v888 = vld [vmem:[#allocation2] sm:$0xff]
        %v889 = vld [vmem:[#allocation2 + $0x8] sm:$0xff]
        %v890 = vld [vmem:[#allocation2 + $0x10] sm:$0xff]
        %v891 = vld [vmem:[#allocation2 + $0x18] sm:$0xff]
        %892 = vmatprep.subr.mxu0 0.0
        %893 = vmatpush1.xpose.msra.mxu0 0.0
        %894 = vmatprep.subr.mxu0 0.0
        %895 = vmatpush1.xpose.msra.mxu0 0.0
        %896 = vmatprep.subr.mxu0 0.0
        %897 = vmatpush1.xpose.msra.mxu0 0.0
        %898 = vmatprep.subr.mxu0 0.0
        %899 = vmatpush1.xpose.msra.mxu0 0.0
        %900 = vmatprep.subr.mxu0 0.0
        %901 = vmatpush1.xpose.msra.mxu0 0.0
        %902 = vmatprep.subr.mxu0 0.0
        %903 = vmatpush1.xpose.msra.mxu0 0.0
        %904 = vmatprep.subr.mxu0 0.0
        %905 = vmatpush1.xpose.msra.mxu0 0.0
        %906 = vmatprep.subr.mxu0 0.0
        %907 = vmatpush1.xpose.msra.mxu0 0.0
        %908 = vmatprep.subr.mxu0 0.0
        %909 = vmatpush1.xpose.msra.mxu0 0.0
        %910 = vmatprep.subr.mxu0 0.0
        %911 = vmatpush1.xpose.msra.mxu0 0.0
        %912 = vmatprep.subr.mxu0 0.0
        %913 = vmatpush1.xpose.msra.mxu0 0.0
        %914 = vmatprep.subr.mxu0 0.0
        %915 = vmatpush1.xpose.msra.mxu0 0.0
        %916 = vmatprep.subr.mxu0 0.0
        %917 = vmatpush1.xpose.msra.mxu0 %v777
        %918 = vmatprep.subr.mxu0 0.0
        %919 = vmatpush1.xpose.msra.mxu0 %v772
        %920 = vmatprep.subr.mxu0 0.0
        %921 = vmatpush1.xpose.msra.mxu0 %v767
        %922 = vmatprep.subr.mxu0 0.0
        %923 = vmatpush1.xpose.msra.mxu0 %v762
        %924 = vmatprep.subr.mxu0 0.0
        %925 = vmatpush2.xpose.msra.mxu0 0.0
        %926 = vmatprep.subr.mxu0 0.0
        %927 = vmatpush2.xpose.msra.mxu0 0.0
        %928 = vmatprep.subr.mxu0 0.0
        %929 = vmatpush2.xpose.msra.mxu0 0.0
        %930 = vmatprep.subr.mxu0 0.0
        %931 = vmatpush2.xpose.msra.mxu0 0.0
        %932 = vmatprep.subr.mxu0 0.0
        %933 = vmatpush2.xpose.msra.mxu0 0.0
        %934 = vmatprep.subr.mxu0 0.0
        %935 = vmatpush2.xpose.msra.mxu0 0.0
        %936 = vmatprep.subr.mxu0 0.0
        %937 = vmatpush2.xpose.msra.mxu0 0.0
        %938 = vmatprep.subr.mxu0 0.0
        %939 = vmatpush2.xpose.msra.mxu0 0.0
        %940 = vmatprep.subr.mxu0 0.0
        %941 = vmatpush2.xpose.msra.mxu0 0.0
        %942 = vmatprep.subr.mxu0 0.0
        %943 = vmatpush2.xpose.msra.mxu0 0.0
        %944 = vmatprep.subr.mxu0 0.0
        %945 = vmatpush2.xpose.msra.mxu0 0.0
        %946 = vmatprep.subr.mxu0 0.0
        %947 = vmatpush2.xpose.msra.mxu0 0.0
        %948 = vmatprep.subr.mxu0 0.0
        %949 = vmatpush2.xpose.msra.mxu0 0.0
        %950 = vmatprep.subr.mxu0 0.0
        %951 = vmatpush2.xpose.msra.mxu0 0.0
        %952 = vmatprep.subr.mxu0 0.0
        %953 = vmatpush2.xpose.msra.mxu0 0.0
        %954 = vmatprep.subr.mxu0 0.0
        %955 = vmatpush2.xpose.msra.mxu0 0.0
        %956 = vmatprep.mubr.f32.mxu0 0.0
        %957 = vmatmul.mubr.f32.gmra.mxu0 %v888
        %v958 = vpop.f32.mrf.mxu0
        %v959 = vadd.f32 0.0, %v958
        %v960 = vpop.f32.mrf.mxu0
        %961 = vmatprep.mubr.f32.mxu0 0.0
        %962 = vmatmul.mubr.f32.gmra.mxu0 %v889
        %v963 = vpop.f32.mrf.mxu0
        %v964 = vadd.f32 0.0, %v963
        %v965 = vpop.f32.mrf.mxu0
        %966 = vmatprep.mubr.f32.mxu0 0.0
        %967 = vmatmul.mubr.f32.gmra.mxu0 %v890
        %v968 = vpop.f32.mrf.mxu0
        %v969 = vadd.f32 0.0, %v968
        %v970 = vpop.f32.mrf.mxu0
        %971 = vmatprep.mubr.f32.mxu0 0.0
        %972 = vmatmul.mubr.f32.gmra.mxu0 %v891
        %v973 = vpop.f32.mrf.mxu0
        %v974 = vadd.f32 0.0, %v973
        %v975 = vpop.f32.mrf.mxu0
        %976 = vdwg.mxu0
        %v977 = vld [vmem:[#allocation3] sm:$0xff]
        %v978 = vld [vmem:[#allocation3 + $0x8] sm:$0xff]
        %v979 = vld [vmem:[#allocation3 + $0x10] sm:$0xff]
        %v980 = vld [vmem:[#allocation3 + $0x18] sm:$0xff]
        %vm981 = vcmask 261120
        %v982 = vsel %vm981, %v959, -inf
        %983 = vmax.xlane.f32.xlu0 %v982
        %v984 = vpop.xlane.xlu0 %983
        %v985 = vsel %vm981, %v964, -inf
        %986 = vmax.xlane.f32.xlu0 %v985
        %v987 = vpop.xlane.xlu0 %986
        %v988 = vsel %vm981, %v969, -inf
        %989 = vmax.xlane.f32.xlu0 %v988
        %v990 = vpop.xlane.xlu0 %989
        %v991 = vsel %vm981, %v974, -inf
        %992 = vmax.xlane.f32.xlu0 %v991
        %v993 = vpop.xlane.xlu0 %992
        %v994 = vmax.f32 %v977, %v984
        %v995 = vmax.f32 %v978, %v987
        %v996 = vmax.f32 %v979, %v990
        %v997 = vmax.f32 %v980, %v993
        %v998 = vsub.f32 %v977, %v994
        %v999 = vsub.f32 %v978, %v995
        %v1000 = vsub.f32 %v979, %v996
        %v1001 = vsub.f32 %v980, %v997
        %v1002 = vmul.f32 %v998, 1.442695
        %v1003 = vpow.pop %v1002
        %v1004 = vmul.f32 %v999, 1.442695
        %v1005 = vpow.pop %v1004
        %v1006 = vmul.f32 %v1000, 1.442695
        %v1007 = vpow.pop %v1006
        %v1008 = vmul.f32 %v1001, 1.442695
        %v1009 = vpow.pop %v1008
        %1011 = vset.pattern.permute.xlu0 0
        %1012 = vperm.xlu0 %1011, %v994
        %v1013 = vpop.permute.xlu0 %1012
        %1016 = vset.pattern.permute.xlu0 0
        %1017 = vperm.xlu0 %1016, %v995
        %v1018 = vpop.permute.xlu0 %1017
        %1021 = vset.pattern.permute.xlu0 0
        %1022 = vperm.xlu0 %1021, %v996
        %v1023 = vpop.permute.xlu0 %1022
        %1026 = vset.pattern.permute.xlu0 0
        %1027 = vperm.xlu0 %1026, %v997
        %v1028 = vpop.permute.xlu0 %1027
        %v1030 = vsub.f32 %v959, %v1013
        %v1031 = vsub.f32 %v964, %v1018
        %v1032 = vsub.f32 %v969, %v1023
        %v1033 = vsub.f32 %v974, %v1028
        %v1034 = vmul.f32 %v1030, 1.442695
        %v1035 = vpow.pop %v1034
        %v1036 = vmul.f32 %v1031, 1.442695
        %v1037 = vpow.pop %v1036
        %v1038 = vmul.f32 %v1032, 1.442695
        %v1039 = vpow.pop %v1038
        %v1040 = vmul.f32 %v1033, 1.442695
        %v1041 = vpow.pop %v1040
        %v1042 = vld [vmem:[#allocation4] sm:$0xff]
        %v1043 = vld [vmem:[#allocation4 + $0x8] sm:$0xff]
        %v1044 = vld [vmem:[#allocation4 + $0x10] sm:$0xff]
        %v1045 = vld [vmem:[#allocation4 + $0x18] sm:$0xff]
        %v1046 = vmul.f32 %v1003, %v1042
        %v1047 = vmul.f32 %v1005, %v1043
        %v1048 = vmul.f32 %v1007, %v1044
        %v1049 = vmul.f32 %v1009, %v1045
        %v1050 = vsel %vm981, %v1035, 0.0
        %1051 = vadd.xlane.f32.xlu0 %v1050
        %v1052 = vpop.xlane.xlu0 %1051
        %v1053 = vsel %vm981, %v1037, 0.0
        %1054 = vadd.xlane.f32.xlu0 %v1053
        %v1055 = vpop.xlane.xlu0 %1054
        %v1056 = vsel %vm981, %v1039, 0.0
        %1057 = vadd.xlane.f32.xlu0 %v1056
        %v1058 = vpop.xlane.xlu0 %1057
        %v1059 = vsel %vm981, %v1041, 0.0
        %1060 = vadd.xlane.f32.xlu0 %v1059
        %v1061 = vpop.xlane.xlu0 %1060
        %v1062 = vadd.f32 %v1046, %v1052
        %v1063 = vadd.f32 %v1047, %v1055
        %v1064 = vadd.f32 %v1048, %v1058
        %v1065 = vadd.f32 %v1049, %v1061
        %vm1066 = vcmask 7168
        %1067 = vst.msk [vmem:[#allocation4] sm:$0xff] %vm1066, %v1062
        %1068 = vst.msk [vmem:[#allocation4 + $0x8] sm:$0xff] %vm1066, %v1063
        %1069 = vst.msk [vmem:[#allocation4 + $0x10] sm:$0xff] %vm1066, %v1064
        %1070 = vst.msk [vmem:[#allocation4 + $0x18] sm:$0xff] %vm1066, %v1065
        %v1071 = vld [vmem:[#allocation5] sm:$0xff]
        %v1072 = vld [vmem:[#allocation5 + $0x8] sm:$0xff]
        %v1073 = vld [vmem:[#allocation5 + $0x10] sm:$0xff]
        %v1074 = vld [vmem:[#allocation5 + $0x18] sm:$0xff]
        %1076 = vset.pattern.permute.xlu0 0
        %1077 = vperm.xlu0 %1076, %v1003
        %v1078 = vpop.permute.xlu0 %1077
        %1081 = vset.pattern.permute.xlu0 0
        %1082 = vperm.xlu0 %1081, %v1005
        %v1083 = vpop.permute.xlu0 %1082
        %1086 = vset.pattern.permute.xlu0 0
        %1087 = vperm.xlu0 %1086, %v1007
        %v1088 = vpop.permute.xlu0 %1087
        %1091 = vset.pattern.permute.xlu0 0
        %1092 = vperm.xlu0 %1091, %v1009
        %v1093 = vpop.permute.xlu0 %1092
        %v1095 = vmul.f32 %v1078, %v1071
        %v1096 = vmul.f32 %v1083, %v1072
        %v1097 = vmul.f32 %v1088, %v1073
        %v1098 = vmul.f32 %v1093, %v1074
        %v1100 = vsel %vm981, %v1035, 0
        %v1103 = vsel %vm981, %v1037, 0
        %v1106 = vsel %vm981, %v1039, 0
        %v1109 = vsel %vm981, %v1041, 0
        %1111 = vmatprep.subr.mxu0 0.0
        %1112 = vmatpush1.msra.mxu0 0.0
        %1113 = vmatprep.subr.mxu0 0.0
        %1114 = vmatpush1.msra.mxu0 0.0
        %1115 = vmatprep.subr.mxu0 0.0
        %1116 = vmatpush1.msra.mxu0 0.0
        %1117 = vmatprep.subr.mxu0 0.0
        %1118 = vmatpush1.msra.mxu0 0.0
        %1119 = vmatprep.subr.mxu0 0.0
        %1120 = vmatpush1.msra.mxu0 0.0
        %1121 = vmatprep.subr.mxu0 0.0
        %1122 = vmatpush1.msra.mxu0 0.0
        %1123 = vmatprep.subr.mxu0 0.0
        %1124 = vmatpush1.msra.mxu0 0.0
        %1125 = vmatprep.subr.mxu0 0.0
        %1126 = vmatpush1.msra.mxu0 0.0
        %1127 = vmatprep.subr.mxu0 0.0
        %1128 = vmatpush1.msra.mxu0 0.0
        %1129 = vmatprep.subr.mxu0 0.0
        %1130 = vmatpush1.msra.mxu0 0.0
        %1131 = vmatprep.subr.mxu0 0.0
        %1132 = vmatpush1.msra.mxu0 0.0
        %1133 = vmatprep.subr.mxu0 0.0
        %1134 = vmatpush1.msra.mxu0 0.0
        %1135 = vmatprep.subr.mxu0 0.0
        %1136 = vmatpush1.msra.mxu0 %v885
        %1137 = vmatprep.subr.mxu0 0.0
        %1138 = vmatpush1.msra.mxu0 %v880
        %1139 = vmatprep.subr.mxu0 0.0
        %1140 = vmatpush1.msra.mxu0 %v875
        %1141 = vmatprep.subr.mxu0 0.0
        %1142 = vmatpush1.msra.mxu0 %v870
        %1143 = vmatprep.subr.mxu0 0.0
        %1144 = vmatpush2.msra.mxu0 0.0
        %1145 = vmatprep.subr.mxu0 0.0
        %1146 = vmatpush2.msra.mxu0 0.0
        %1147 = vmatprep.subr.mxu0 0.0
        %1148 = vmatpush2.msra.mxu0 0.0
        %1149 = vmatprep.subr.mxu0 0.0
        %1150 = vmatpush2.msra.mxu0 0.0
        %1151 = vmatprep.subr.mxu0 0.0
        %1152 = vmatpush2.msra.mxu0 0.0
        %1153 = vmatprep.subr.mxu0 0.0
        %1154 = vmatpush2.msra.mxu0 0.0
        %1155 = vmatprep.subr.mxu0 0.0
        %1156 = vmatpush2.msra.mxu0 0.0
        %1157 = vmatprep.subr.mxu0 0.0
        %1158 = vmatpush2.msra.mxu0 0.0
        %1159 = vmatprep.subr.mxu0 0.0
        %1160 = vmatpush2.msra.mxu0 0.0
        %1161 = vmatprep.subr.mxu0 0.0
        %1162 = vmatpush2.msra.mxu0 0.0
        %1163 = vmatprep.subr.mxu0 0.0
        %1164 = vmatpush2.msra.mxu0 0.0
        %1165 = vmatprep.subr.mxu0 0.0
        %1166 = vmatpush2.msra.mxu0 0.0
        %1167 = vmatprep.subr.mxu0 0.0
        %1168 = vmatpush2.msra.mxu0 0.0
        %1169 = vmatprep.subr.mxu0 0.0
        %1170 = vmatpush2.msra.mxu0 0.0
        %1171 = vmatprep.subr.mxu0 0.0
        %1172 = vmatpush2.msra.mxu0 0.0
        %1173 = vmatprep.subr.mxu0 0.0
        %1174 = vmatpush2.msra.mxu0 0.0
        %1175 = vmatprep.mubr.f32.mxu0 0.0
        %1176 = vmatmul.mubr.f32.gmra.mxu0 %v1100
        %v1177 = vpop.f32.mrf.mxu0
        %v1178 = vadd.f32 0.0, %v1177
        %v1179 = vpop.f32.mrf.mxu0
        %1180 = vmatprep.mubr.f32.mxu0 0.0
        %1181 = vmatmul.mubr.f32.gmra.mxu0 %v1103
        %v1182 = vpop.f32.mrf.mxu0
        %v1183 = vadd.f32 0.0, %v1182
        %v1184 = vpop.f32.mrf.mxu0
        %1185 = vmatprep.mubr.f32.mxu0 0.0
        %1186 = vmatmul.mubr.f32.gmra.mxu0 %v1106
        %v1187 = vpop.f32.mrf.mxu0
        %v1188 = vadd.f32 0.0, %v1187
        %v1189 = vpop.f32.mrf.mxu0
        %1190 = vmatprep.mubr.f32.mxu0 0.0
        %1191 = vmatmul.mubr.f32.gmra.mxu0 %v1109
        %v1192 = vpop.f32.mrf.mxu0
        %v1193 = vadd.f32 0.0, %v1192
        %v1194 = vpop.f32.mrf.mxu0
        %1195 = vdwg.mxu0
        %v1196 = vadd.f32 %v1095, %v1178
        %v1197 = vadd.f32 %v1096, %v1183
        %v1198 = vadd.f32 %v1097, %v1188
        %v1199 = vadd.f32 %v1098, %v1193
        %1200 = vst [vmem:[#allocation5] sm:$0xff] %v1196
        %1201 = vst [vmem:[#allocation5 + $0x8] sm:$0xff] %v1197
        %1202 = vst [vmem:[#allocation5 + $0x10] sm:$0xff] %v1198
        %1203 = vst [vmem:[#allocation5 + $0x18] sm:$0xff] %v1199
        %1204 = vst.msk [vmem:[#allocation3] sm:$0xff] %vm1066, %v994
        %1205 = vst.msk [vmem:[#allocation3 + $0x8] sm:$0xff] %vm1066, %v995
        %1206 = vst.msk [vmem:[#allocation3 + $0x10] sm:$0xff] %vm1066, %v996
        %1207 = vst.msk [vmem:[#allocation3 + $0x18] sm:$0xff] %vm1066, %v997
        // Predicated region
        $region93: #{tpu_custom_call.1} parent=63 // pred_check
          %p1208 = pneg %p535
        $region94: #{tpu_custom_call.1} parent=63 // pred_check_branch
          %1210 = sbr.rel (%p1208) target = $region96
        $region95: #{tpu_custom_call.1} parent=63 // pred_region
          %v1211 = vld [vmem:[#allocation4] sm:$0xff]
          %v1212 = vld [vmem:[#allocation4 + $0x8] sm:$0xff]
          %v1213 = vld [vmem:[#allocation4 + $0x10] sm:$0xff]
          %v1214 = vld [vmem:[#allocation4 + $0x18] sm:$0xff]
          %v1215 = vrcp.pop %v1211
          %v1216 = vrcp.pop %v1212
          %v1217 = vrcp.pop %v1213
          %v1218 = vrcp.pop %v1214
          %v1219 = vld [vmem:[#allocation5] sm:$0xff]
          %v1220 = vld [vmem:[#allocation5 + $0x8] sm:$0xff]
          %v1221 = vld [vmem:[#allocation5 + $0x10] sm:$0xff]
          %v1222 = vld [vmem:[#allocation5 + $0x18] sm:$0xff]
          %1224 = vset.pattern.permute.xlu0 0
          %1225 = vperm.xlu0 %1224, %v1215
          %v1226 = vpop.permute.xlu0 %1225
          %1229 = vset.pattern.permute.xlu0 0
          %1230 = vperm.xlu0 %1229, %v1216
          %v1231 = vpop.permute.xlu0 %1230
          %1234 = vset.pattern.permute.xlu0 0
          %1235 = vperm.xlu0 %1234, %v1217
          %v1236 = vpop.permute.xlu0 %1235
          %1239 = vset.pattern.permute.xlu0 0
          %1240 = vperm.xlu0 %1239, %v1218
          %v1241 = vpop.permute.xlu0 %1240
          %v1243 = vmul.f32 %v1219, %v1226
          %v1244 = vmul.f32 %v1220, %v1231
          %v1245 = vmul.f32 %v1221, %v1236
          %v1246 = vmul.f32 %v1222, %v1241
          %v1247 = vld [vmem:[#allocation15] sm:$0xff]
          %v1248 = vld [vmem:[#allocation15 + $0x8] sm:$0xff]
          %v1249 = vld [vmem:[#allocation15 + $0x10] sm:$0xff]
          %v1250 = vld [vmem:[#allocation15 + $0x18] sm:$0xff]
          %v1251 = vld [vmem:[#allocation15 + $0x20] sm:$0xff]
          %v1252 = vld [vmem:[#allocation15 + $0x28] sm:$0xff]
          %v1253 = vld [vmem:[#allocation15 + $0x30] sm:$0xff]
          %v1254 = vld [vmem:[#allocation15 + $0x38] sm:$0xff]
          %v1255 = vld [vmem:[#allocation15 + $0x40] sm:$0xff]
          %v1256 = vld [vmem:[#allocation15 + $0x48] sm:$0xff]
          %v1257 = vld [vmem:[#allocation15 + $0x50] sm:$0xff]
          %v1258 = vld [vmem:[#allocation15 + $0x58] sm:$0xff]
          %v1259 = vld [vmem:[#allocation15 + $0x60] sm:$0xff]
          %v1260 = vld [vmem:[#allocation15 + $0x68] sm:$0xff]
          %v1261 = vld [vmem:[#allocation15 + $0x70] sm:$0xff]
          %v1262 = vld [vmem:[#allocation15 + $0x78] sm:$0xff]
          %1263 = vmatprep.subr.mxu0 0.0
          %1264 = vmatpush1.msra.mxu0 %v1262
          %1265 = vmatprep.subr.mxu0 0.0
          %1266 = vmatpush1.msra.mxu0 %v1261
          %1267 = vmatprep.subr.mxu0 0.0
          %1268 = vmatpush1.msra.mxu0 %v1260
          %1269 = vmatprep.subr.mxu0 0.0
          %1270 = vmatpush1.msra.mxu0 %v1259
          %1271 = vmatprep.subr.mxu0 0.0
          %1272 = vmatpush1.msra.mxu0 %v1258
          %1273 = vmatprep.subr.mxu0 0.0
          %1274 = vmatpush1.msra.mxu0 %v1257
          %1275 = vmatprep.subr.mxu0 0.0
          %1276 = vmatpush1.msra.mxu0 %v1256
          %1277 = vmatprep.subr.mxu0 0.0
          %1278 = vmatpush1.msra.mxu0 %v1255
          %1279 = vmatprep.subr.mxu0 0.0
          %1280 = vmatpush1.msra.mxu0 %v1254
          %1281 = vmatprep.subr.mxu0 0.0
          %1282 = vmatpush1.msra.mxu0 %v1253
          %1283 = vmatprep.subr.mxu0 0.0
          %1284 = vmatpush1.msra.mxu0 %v1252
          %1285 = vmatprep.subr.mxu0 0.0
          %1286 = vmatpush1.msra.mxu0 %v1251
          %1287 = vmatprep.subr.mxu0 0.0
          %1288 = vmatpush1.msra.mxu0 %v1250
          %1289 = vmatprep.subr.mxu0 0.0
          %1290 = vmatpush1.msra.mxu0 %v1249
          %1291 = vmatprep.subr.mxu0 0.0
          %1292 = vmatpush1.msra.mxu0 %v1248
          %1293 = vmatprep.subr.mxu0 0.0
          %1294 = vmatpush1.msra.mxu0 %v1247
          %1295 = vmatprep.subr.mxu0 0.0
          %1296 = vmatpush2.msra.mxu0 0.0
          %1297 = vmatprep.subr.mxu0 0.0
          %1298 = vmatpush2.msra.mxu0 0.0
          %1299 = vmatprep.subr.mxu0 0.0
          %1300 = vmatpush2.msra.mxu0 0.0
          %1301 = vmatprep.subr.mxu0 0.0
          %1302 = vmatpush2.msra.mxu0 0.0
          %1303 = vmatprep.subr.mxu0 0.0
          %1304 = vmatpush2.msra.mxu0 0.0
          %1305 = vmatprep.subr.mxu0 0.0
          %1306 = vmatpush2.msra.mxu0 0.0
          %1307 = vmatprep.subr.mxu0 0.0
          %1308 = vmatpush2.msra.mxu0 0.0
          %1309 = vmatprep.subr.mxu0 0.0
          %1310 = vmatpush2.msra.mxu0 0.0
          %1311 = vmatprep.subr.mxu0 0.0
          %1312 = vmatpush2.msra.mxu0 0.0
          %1313 = vmatprep.subr.mxu0 0.0
          %1314 = vmatpush2.msra.mxu0 0.0
          %1315 = vmatprep.subr.mxu0 0.0
          %1316 = vmatpush2.msra.mxu0 0.0
          %1317 = vmatprep.subr.mxu0 0.0
          %1318 = vmatpush2.msra.mxu0 0.0
          %1319 = vmatprep.subr.mxu0 0.0
          %1320 = vmatpush2.msra.mxu0 0.0
          %1321 = vmatprep.subr.mxu0 0.0
          %1322 = vmatpush2.msra.mxu0 0.0
          %1323 = vmatprep.subr.mxu0 0.0
          %1324 = vmatpush2.msra.mxu0 0.0
          %1325 = vmatprep.subr.mxu0 0.0
          %1326 = vmatpush2.msra.mxu0 0.0
          %1327 = vmatprep.mubr.f32.mxu0 0.0
          %1328 = vmatmul.mubr.f32.gmra.mxu0 %v1243
          %v1329 = vpop.f32.mrf.mxu0
          %v1330 = vadd.f32 0.0, %v1329
          %v1331 = vpop.f32.mrf.mxu0
          %1332 = vmatprep.mubr.f32.mxu0 0.0
          %1333 = vmatmul.mubr.f32.gmra.mxu0 %v1244
          %v1334 = vpop.f32.mrf.mxu0
          %v1335 = vadd.f32 0.0, %v1334
          %v1336 = vpop.f32.mrf.mxu0
          %1337 = vmatprep.mubr.f32.mxu0 0.0
          %1338 = vmatmul.mubr.f32.gmra.mxu0 %v1245
          %v1339 = vpop.f32.mrf.mxu0
          %v1340 = vadd.f32 0.0, %v1339
          %v1341 = vpop.f32.mrf.mxu0
          %1342 = vmatprep.mubr.f32.mxu0 0.0
          %1343 = vmatmul.mubr.f32.gmra.mxu0 %v1246
          %v1344 = vpop.f32.mrf.mxu0
          %v1345 = vadd.f32 0.0, %v1344
          %v1346 = vpop.f32.mrf.mxu0
          %1347 = vdwg.mxu0
          %v1348 = vld [vmem:[%s9] sm:$0x1]
          %v1350 = vlaneseq
          %v1351 = vshrl.u32 %v1350, 7
          %v1352 = vsub.s32 0, %v1351
          %v1353 = vrot.slane %v1348, %v1352
          %v1355 = vmul.f32 %v1330, %v1353
          %v1356 = vmul.f32 %v1335, %v1353
          %v1357 = vmul.f32 %v1340, %v1353
          %v1358 = vmul.f32 %v1345, %v1353
          %v1359 = vld [vmem:[%s10] sm:$0x1]
          %v1361 = vlaneseq
          %v1362 = vshrl.u32 %v1361, 7
          %v1363 = vsub.s32 0, %v1362
          %v1364 = vrot.slane %v1359, %v1363
          %v1366 = vadd.f32 %v1355, %v1364
          %v1367 = vadd.f32 %v1356, %v1364
          %v1368 = vadd.f32 %v1357, %v1364
          %v1369 = vadd.f32 %v1358, %v1364
          %v1370 = vld [vmem:[%s463] sm:$0xff]
          %v1371 = vld [vmem:[%s463 + $0x8] sm:$0xff]
          %v1372 = vld [vmem:[%s463 + $0x10] sm:$0xff]
          %v1373 = vld [vmem:[%s463 + $0x18] sm:$0xff]
          %v1374 = vadd.f32 %v1366, %v1370
          %v1375 = vadd.f32 %v1367, %v1371
          %v1376 = vadd.f32 %v1368, %v1372
          %v1377 = vadd.f32 %v1369, %v1373
          %1378 = vst [vmem:[%s531] sm:$0xff] %v1374
          %1379 = vst [vmem:[%s531 + $0x8] sm:$0xff] %v1375
          %1380 = vst [vmem:[%s531 + $0x10] sm:$0xff] %v1376
          %1381 = vst [vmem:[%s531 + $0x18] sm:$0xff] %v1377
        $region96: #{tpu_custom_call.1} parent=63 // pred_fallthru
          _
        %s1382 = sand.u32 %s307, 1
        %s1383 = scalar_lea.sflag [#allocation8], %s1382
        %s1384 = sand.u32 %s307, 1
        %s1385 = smul.addr %s1384, 32
        %s1386 = scalar_lea.vmem [#allocation17], %s1385
        // Predicated region
        $region97: #{tpu_custom_call.1} parent=63 // pred_check
          %p1387 = pneg %p317
        $region98: #{tpu_custom_call.1} parent=63 // pred_check_branch
          %1389 = sbr.rel (%p1387) target = $region100
        $region99: #{tpu_custom_call.1} parent=63 // pred_region
          %s1390 = smul.u32 4, %s39
          %s1392 = ssub.s32 512, 512
          %1393 = vsyncadd %s1383, %s1392
          %s1394 = smul.addr %s38, 4
          %s1395 = sadd.s32 %s1390, %s1394
          %s1396 = smul.addr %s1395, 128
          %s1397 = scalar_lea.hbm %s11, %s1396
          %s1398 = sshll.u32 %s1386, 4
          %s1399 = int_to_ptr.vmem [resolvable:$true] %s1398
          %1404 = dma.vmem_to_hbm [thread:$0]  %s1399, 512, %s1397, %s1383, 128, 128, 8
        $region100: #{tpu_custom_call.1} parent=63 // pred_fallthru
          _
      $region64: #{tpu_custom_call.1} parent=5 // pred_fallthru
        _
      %p1405 = scmp.le.s32.totalorder 2, %s28
      // Predicated region
      $region101: #{tpu_custom_call.1} parent=5 // pred_check
        %p1406 = pneg %p1405
      $region102: #{tpu_custom_call.1} parent=5 // pred_check_branch
        %1408 = sbr.rel (%p1406) target = $region104
      $region103: #{tpu_custom_call.1} parent=5 // pred_region
        %s1409 = ssub.s32 %s28, 2
        // Predicated region
        $region105: #{tpu_custom_call.1} parent=103 // pred_check
          %p1410 = pneg %p323
        $region106: #{tpu_custom_call.1} parent=103 // pred_check_branch
          %1412 = sbr.rel (%p1410) target = $region108
        $region107: #{tpu_custom_call.1} parent=103 // pred_region
          %s1413 = sand.u32 %s308, 1
          %s1414 = scalar_lea.sflag [#allocation8], %s1413
          %s1415 = sand.u32 %s308, 1
          %s1416 = smul.addr %s1415, 32
          %s1417 = scalar_lea.vmem [#allocation17], %s1416
          %1418 = dma.done %s1414, 512
        $region108: #{tpu_custom_call.1} parent=103 // pred_fallthru
          _
      $region104: #{tpu_custom_call.1} parent=5 // pred_fallthru
        _
    $region6: #{tpu_custom_call.1} parent=1 // loop_footer
      %s32 = sadd.s32 1, %s28
    $region7: #{tpu_custom_call.1} parent=1 // loop_footer_branch
      %27 = sbr.rel target = $region3
    $region8: #{tpu_custom_call.1} parent=1 // loop_exit
      _
    %1419 = vsyncpa [#allocation7], 1
    %s1420 = scalar_lea.sflag [#allocation7], 1
    %1421 = vsyncpa %s1420, 1
    %1422 = vsyncpa [#allocation10], 1
    %s1423 = scalar_lea.sflag [#allocation10], 1
    %1424 = vsyncpa %s1423, 1
    %1425 = vsyncpa [#allocation13], 1
    %1426 = vsyncpa [#allocation16], 1
    %1427 = vsyncpa [#allocation8], 1
    %s1428 = scalar_lea.sflag [#allocation8], 1
    %1429 = vsyncpa %s1428, 1

</llo_original>
